<compile_context>
chip_gen: v7x
topology: tpu7x:2x2x1
jax: 0.10.0
libtpu: 0.0.40
codegen_flags: <defaults>
</compile_context>

<pallas_src>
import jax
import jax.numpy as jnp
from jax import lax
from jax.experimental import pallas as pl
from jax.experimental.pallas import tpu as pltpu


def lstm_recurrence_kernel(xw_ref, whh_ref, wlin_ref, blin_ref, out_ref):
    """Serial LSTM recurrence + final linear head, all state in registers.

    xw_ref   : (T, B, 4H)  precomputed x @ W_ih^T + (b_ih + b_hh), gate order [i,f,o,g]
    whh_ref  : (H, 4H)     W_hh^T, gate order [i,f,o,g]
    wlin_ref : (H, O)      W_linear^T
    blin_ref : (1, O)
    out_ref  : (B, O)      prediction at the last timestep
    """
    T = xw_ref.shape[0]
    B = xw_ref.shape[1]
    H = whh_ref.shape[0]

    # Hoist the recurrent weight load out of the loop (constant across steps).
    whh = whh_ref[...]                      # (H, 4H)

    h0 = jnp.zeros((B, H), jnp.float32)
    c0 = jnp.zeros((B, H), jnp.float32)

    def step(t, carry):
        h, c = carry
        # Only the serial dependency lives in the loop: one (B,H)@(H,4H) matmul + add.
        gates = xw_ref[t] + jnp.dot(h, whh, preferred_element_type=jnp.float32)  # (B,4H)
        # Gate order [i, f, o, g]: one sigmoid slab + one tanh slab.
        sig = jax.nn.sigmoid(gates[:, : 3 * H])     # (B, 3H) -> i, f, o
        g_g = jnp.tanh(gates[:, 3 * H:])            # (B, H)
        i_g = sig[:, 0 * H:1 * H]
        f_g = sig[:, 1 * H:2 * H]
        o_g = sig[:, 2 * H:3 * H]
        c_new = f_g * c + i_g * g_g
        h_new = o_g * jnp.tanh(c_new)
        return h_new, c_new

    # Fully unrolled short recurrence; h/c stay in vregs across the whole chain.
    h_fin, _ = lax.fori_loop(0, T, step, (h0, c0), unroll=True)

    # Final linear on the last hidden state (== predictions[:, -1, :]).
    out_ref[...] = (
        jnp.dot(h_fin, wlin_ref[...], preferred_element_type=jnp.float32)
        + blin_ref[...]
    )


def _reorder_ifgo_to_ifog(w, axis=0):
    """PyTorch packs gate rows as [i, f, g, o]; reorder to [i, f, o, g]."""
    i, f, g, o = jnp.split(w, 4, axis=axis)
    return jnp.concatenate([i, f, o, g], axis=axis)


def lstm_forward(x, w_ih, w_hh, b_ih, b_hh, w_lin, b_lin):
    """x: (B, T, I) batch_first; PyTorch-shaped params. Returns (B, O)."""
    B, T, I = x.shape
    H = w_hh.shape[1]
    O = w_lin.shape[0]

    x_f32 = x.astype(jnp.float32)
    w_ih_r = _reorder_ifgo_to_ifog(w_ih.astype(jnp.float32))        # (4H, I)
    w_hh_r = _reorder_ifgo_to_ifog(w_hh.astype(jnp.float32))        # (4H, H)
    b_r = _reorder_ifgo_to_ifog((b_ih + b_hh).astype(jnp.float32))  # (4H,)

    # Hoisted input projection + bias: one (T*B, I) @ (I, 4H) matmul (I=1 -> broadcast
    # multiply), done once outside the serial chain.  Time-major so xw[t] is (B, 4H).
    xw = jnp.einsum("bti,gi->tbg", x_f32, w_ih_r) + b_r[None, None, :]   # (T, B, 4H)

    whh_t = jnp.transpose(w_hh_r)                                    # (H, 4H)
    wlin_t = jnp.transpose(w_lin).astype(jnp.float32)                # (H, O)
    blin = b_lin.reshape(1, O).astype(jnp.float32)                   # (1, O)

    vmem = pl.BlockSpec(memory_space=pltpu.MemorySpace.VMEM)

    return pl.pallas_call(
        lstm_recurrence_kernel,
        out_shape=jax.ShapeDtypeStruct((B, O), jnp.float32),
        in_specs=[vmem] * 4,
        out_specs=vmem,
    )(xw, whh_t, wlin_t, blin)


def lstm_forward_ref(x, w_ih, w_hh, b_ih, b_hh, w_lin, b_lin):
    """Pure-JAX reference with original PyTorch LSTM gate order (i, f, g, o)."""
    B, T, I = x.shape
    H = w_hh.shape[1]
    h = jnp.zeros((B, H), jnp.float32)
    c = jnp.zeros((B, H), jnp.float32)
    for t in range(T):
        g = x[:, t, :] @ w_ih.T + b_ih + h @ w_hh.T + b_hh
        i_g = jax.nn.sigmoid(g[:, 0 * H:1 * H])
        f_g = jax.nn.sigmoid(g[:, 1 * H:2 * H])
        g_g = jnp.tanh(g[:, 2 * H:3 * H])
        o_g = jax.nn.sigmoid(g[:, 3 * H:4 * H])
        c = f_g * c + i_g * g_g
        h = o_g * jnp.tanh(c)
    return h @ w_lin.T + b_lin


if __name__ == "__main__":
    # Module defaults: input_size=1, num_layers=1, hidden_layer_size=64,
    # output_size=1, window=15.  Small batch of 2.
    B, T, I, H, O = 2, 15, 1, 64, 1

    key = jax.random.PRNGKey(0)
    k = jax.random.split(key, 7)
    bound = 1.0 / jnp.sqrt(H)  # PyTorch default uniform(-1/sqrt(H), 1/sqrt(H))

    w_ih = jax.random.uniform(k[0], (4 * H, I), jnp.float32, -bound, bound)
    w_hh = jax.random.uniform(k[1], (4 * H, H), jnp.float32, -bound, bound)
    b_ih = jax.random.uniform(k[2], (4 * H,), jnp.float32, -bound, bound)
    b_hh = jax.random.uniform(k[3], (4 * H,), jnp.float32, -bound, bound)
    w_lin = jax.random.uniform(k[4], (O, H), jnp.float32, -bound, bound)
    b_lin = jax.random.uniform(k[5], (O,), jnp.float32, -bound, bound)

    x = jax.random.normal(k[6], (B, T, I), jnp.float32)

    out = lstm_forward(x, w_ih, w_hh, b_ih, b_hh, w_lin, b_lin)
    out = jax.block_until_ready(out)

    ref = lstm_forward_ref(x, w_ih, w_hh, b_ih, b_hh, w_lin, b_lin)
    assert out.shape == (B, O)
    assert jnp.allclose(out, ref, atol=1e-4, rtol=1e-4), (out, ref)

    # TODO(synk): training/data-loading/prediction-loop methods of the module are
    # host-side Python and are intentionally not part of the kernel.
    print("KERNEL_OK")
</pallas_src>

<mosaic_0001>
module attributes {stable_mosaic.version = 11 : i64} {
  func.func @lstm_recurrence_kernel(%arg0: memref<15x2x256xf32, #tpu.memory_space<vmem>>, %arg1: memref<64x256xf32, #tpu.memory_space<vmem>>, %arg2: memref<64x1xf32, #tpu.memory_space<vmem>>, %arg3: memref<1x1xf32, #tpu.memory_space<vmem>>, %arg4: memref<2x1xf32, #tpu.memory_space<vmem>>) attributes {dimension_semantics = [], scalar_prefetch = 0 : i64, scratch_operands = 0 : i64, tpu.core_type = #tpu.core_type<tc>} {
    %c0 = arith.constant 0 : index
    %c0_0 = arith.constant 0 : index
    %0 = vector.load %arg1[%c0, %c0_0] : memref<64x256xf32, #tpu.memory_space<vmem>>, vector<64x256xf32>
    %cst = arith.constant 0.000000e+00 : f32
    %1 = vector.broadcast %cst : f32 to vector<2x64xf32>
    %cst_1 = arith.constant 0.000000e+00 : f32
    %2 = vector.broadcast %cst_1 : f32 to vector<2x64xf32>
    %c0_i32 = arith.constant 0 : i32
    %3 = arith.index_cast %c0_i32 : i32 to index
    %c0_2 = arith.constant 0 : index
    %c0_3 = arith.constant 0 : index
    %4 = vector.load %arg0[%3, %c0_2, %c0_3] : memref<15x2x256xf32, #tpu.memory_space<vmem>>, vector<1x2x256xf32>
    %5 = vector.shape_cast %4 : vector<1x2x256xf32> to vector<2x256xf32>
    %cst_4 = arith.constant dense<0.000000e+00> : vector<2x256xf32>
    %6 = tpu.matmul %1, %0, %cst_4 {dimension_numbers = #tpu.dot_dimension_numbers<[1], [0], [0], [1], [0, 0, 1, 1], [], []>} : vector<2x64xf32>, vector<64x256xf32>, vector<2x256xf32> -> vector<2x256xf32>
    %7 = arith.addf %5, %6 : vector<2x256xf32>
    %8 = vector.extract_strided_slice %7 {offsets = [0, 0], sizes = [2, 192], strides = [1, 1]} : vector<2x256xf32> to vector<2x192xf32>
    %9 = arith.negf %8 : vector<2x192xf32>
    %10 = math.exp %9 : vector<2x192xf32>
    %cst_5 = arith.constant 1.000000e+00 : f32
    %11 = vector.broadcast %cst_5 : f32 to vector<2x192xf32>
    %12 = arith.addf %11, %10 : vector<2x192xf32>
    %13 = arith.divf %11, %12 : vector<2x192xf32>
    %14 = vector.extract_strided_slice %7 {offsets = [0, 192], sizes = [2, 64], strides = [1, 1]} : vector<2x256xf32> to vector<2x64xf32>
    %15 = math.tanh %14 : vector<2x64xf32>
    %16 = vector.extract_strided_slice %13 {offsets = [0, 0], sizes = [2, 64], strides = [1, 1]} : vector<2x192xf32> to vector<2x64xf32>
    %17 = vector.extract_strided_slice %13 {offsets = [0, 64], sizes = [2, 64], strides = [1, 1]} : vector<2x192xf32> to vector<2x64xf32>
    %18 = vector.extract_strided_slice %13 {offsets = [0, 128], sizes = [2, 64], strides = [1, 1]} : vector<2x192xf32> to vector<2x64xf32>
    %19 = arith.mulf %17, %2 : vector<2x64xf32>
    %20 = arith.mulf %16, %15 : vector<2x64xf32>
    %21 = arith.addf %19, %20 : vector<2x64xf32>
    %22 = math.tanh %21 : vector<2x64xf32>
    %23 = arith.mulf %18, %22 : vector<2x64xf32>
    %c1_i32 = arith.constant 1 : i32
    %24 = arith.index_cast %c1_i32 : i32 to index
    %c0_6 = arith.constant 0 : index
    %c0_7 = arith.constant 0 : index
    %25 = vector.load %arg0[%24, %c0_6, %c0_7] : memref<15x2x256xf32, #tpu.memory_space<vmem>>, vector<1x2x256xf32>
    %26 = vector.shape_cast %25 : vector<1x2x256xf32> to vector<2x256xf32>
    %cst_8 = arith.constant dense<0.000000e+00> : vector<2x256xf32>
    %27 = tpu.matmul %23, %0, %cst_8 {dimension_numbers = #tpu.dot_dimension_numbers<[1], [0], [0], [1], [0, 0, 1, 1], [], []>} : vector<2x64xf32>, vector<64x256xf32>, vector<2x256xf32> -> vector<2x256xf32>
    %28 = arith.addf %26, %27 : vector<2x256xf32>
    %29 = vector.extract_strided_slice %28 {offsets = [0, 0], sizes = [2, 192], strides = [1, 1]} : vector<2x256xf32> to vector<2x192xf32>
    %30 = arith.negf %29 : vector<2x192xf32>
    %31 = math.exp %30 : vector<2x192xf32>
    %cst_9 = arith.constant 1.000000e+00 : f32
    %32 = vector.broadcast %cst_9 : f32 to vector<2x192xf32>
    %33 = arith.addf %32, %31 : vector<2x192xf32>
    %34 = arith.divf %32, %33 : vector<2x192xf32>
    %35 = vector.extract_strided_slice %28 {offsets = [0, 192], sizes = [2, 64], strides = [1, 1]} : vector<2x256xf32> to vector<2x64xf32>
    %36 = math.tanh %35 : vector<2x64xf32>
    %37 = vector.extract_strided_slice %34 {offsets = [0, 0], sizes = [2, 64], strides = [1, 1]} : vector<2x192xf32> to vector<2x64xf32>
    %38 = vector.extract_strided_slice %34 {offsets = [0, 64], sizes = [2, 64], strides = [1, 1]} : vector<2x192xf32> to vector<2x64xf32>
    %39 = vector.extract_strided_slice %34 {offsets = [0, 128], sizes = [2, 64], strides = [1, 1]} : vector<2x192xf32> to vector<2x64xf32>
    %40 = arith.mulf %38, %21 : vector<2x64xf32>
    %41 = arith.mulf %37, %36 : vector<2x64xf32>
    %42 = arith.addf %40, %41 : vector<2x64xf32>
    %43 = math.tanh %42 : vector<2x64xf32>
    %44 = arith.mulf %39, %43 : vector<2x64xf32>
    %c2_i32 = arith.constant 2 : i32
    %45 = arith.index_cast %c2_i32 : i32 to index
    %c0_10 = arith.constant 0 : index
    %c0_11 = arith.constant 0 : index
    %46 = vector.load %arg0[%45, %c0_10, %c0_11] : memref<15x2x256xf32, #tpu.memory_space<vmem>>, vector<1x2x256xf32>
    %47 = vector.shape_cast %46 : vector<1x2x256xf32> to vector<2x256xf32>
    %cst_12 = arith.constant dense<0.000000e+00> : vector<2x256xf32>
    %48 = tpu.matmul %44, %0, %cst_12 {dimension_numbers = #tpu.dot_dimension_numbers<[1], [0], [0], [1], [0, 0, 1, 1], [], []>} : vector<2x64xf32>, vector<64x256xf32>, vector<2x256xf32> -> vector<2x256xf32>
    %49 = arith.addf %47, %48 : vector<2x256xf32>
    %50 = vector.extract_strided_slice %49 {offsets = [0, 0], sizes = [2, 192], strides = [1, 1]} : vector<2x256xf32> to vector<2x192xf32>
    %51 = arith.negf %50 : vector<2x192xf32>
    %52 = math.exp %51 : vector<2x192xf32>
    %cst_13 = arith.constant 1.000000e+00 : f32
    %53 = vector.broadcast %cst_13 : f32 to vector<2x192xf32>
    %54 = arith.addf %53, %52 : vector<2x192xf32>
    %55 = arith.divf %53, %54 : vector<2x192xf32>
    %56 = vector.extract_strided_slice %49 {offsets = [0, 192], sizes = [2, 64], strides = [1, 1]} : vector<2x256xf32> to vector<2x64xf32>
    %57 = math.tanh %56 : vector<2x64xf32>
    %58 = vector.extract_strided_slice %55 {offsets = [0, 0], sizes = [2, 64], strides = [1, 1]} : vector<2x192xf32> to vector<2x64xf32>
    %59 = vector.extract_strided_slice %55 {offsets = [0, 64], sizes = [2, 64], strides = [1, 1]} : vector<2x192xf32> to vector<2x64xf32>
    %60 = vector.extract_strided_slice %55 {offsets = [0, 128], sizes = [2, 64], strides = [1, 1]} : vector<2x192xf32> to vector<2x64xf32>
    %61 = arith.mulf %59, %42 : vector<2x64xf32>
    %62 = arith.mulf %58, %57 : vector<2x64xf32>
    %63 = arith.addf %61, %62 : vector<2x64xf32>
    %64 = math.tanh %63 : vector<2x64xf32>
    %65 = arith.mulf %60, %64 : vector<2x64xf32>
    %c3_i32 = arith.constant 3 : i32
    %66 = arith.index_cast %c3_i32 : i32 to index
    %c0_14 = arith.constant 0 : index
    %c0_15 = arith.constant 0 : index
    %67 = vector.load %arg0[%66, %c0_14, %c0_15] : memref<15x2x256xf32, #tpu.memory_space<vmem>>, vector<1x2x256xf32>
    %68 = vector.shape_cast %67 : vector<1x2x256xf32> to vector<2x256xf32>
    %cst_16 = arith.constant dense<0.000000e+00> : vector<2x256xf32>
    %69 = tpu.matmul %65, %0, %cst_16 {dimension_numbers = #tpu.dot_dimension_numbers<[1], [0], [0], [1], [0, 0, 1, 1], [], []>} : vector<2x64xf32>, vector<64x256xf32>, vector<2x256xf32> -> vector<2x256xf32>
    %70 = arith.addf %68, %69 : vector<2x256xf32>
    %71 = vector.extract_strided_slice %70 {offsets = [0, 0], sizes = [2, 192], strides = [1, 1]} : vector<2x256xf32> to vector<2x192xf32>
    %72 = arith.negf %71 : vector<2x192xf32>
    %73 = math.exp %72 : vector<2x192xf32>
    %cst_17 = arith.constant 1.000000e+00 : f32
    %74 = vector.broadcast %cst_17 : f32 to vector<2x192xf32>
    %75 = arith.addf %74, %73 : vector<2x192xf32>
    %76 = arith.divf %74, %75 : vector<2x192xf32>
    %77 = vector.extract_strided_slice %70 {offsets = [0, 192], sizes = [2, 64], strides = [1, 1]} : vector<2x256xf32> to vector<2x64xf32>
    %78 = math.tanh %77 : vector<2x64xf32>
    %79 = vector.extract_strided_slice %76 {offsets = [0, 0], sizes = [2, 64], strides = [1, 1]} : vector<2x192xf32> to vector<2x64xf32>
    %80 = vector.extract_strided_slice %76 {offsets = [0, 64], sizes = [2, 64], strides = [1, 1]} : vector<2x192xf32> to vector<2x64xf32>
    %81 = vector.extract_strided_slice %76 {offsets = [0, 128], sizes = [2, 64], strides = [1, 1]} : vector<2x192xf32> to vector<2x64xf32>
    %82 = arith.mulf %80, %63 : vector<2x64xf32>
    %83 = arith.mulf %79, %78 : vector<2x64xf32>
    %84 = arith.addf %82, %83 : vector<2x64xf32>
    %85 = math.tanh %84 : vector<2x64xf32>
    %86 = arith.mulf %81, %85 : vector<2x64xf32>
    %c4_i32 = arith.constant 4 : i32
    %87 = arith.index_cast %c4_i32 : i32 to index
    %c0_18 = arith.constant 0 : index
    %c0_19 = arith.constant 0 : index
    %88 = vector.load %arg0[%87, %c0_18, %c0_19] : memref<15x2x256xf32, #tpu.memory_space<vmem>>, vector<1x2x256xf32>
    %89 = vector.shape_cast %88 : vector<1x2x256xf32> to vector<2x256xf32>
    %cst_20 = arith.constant dense<0.000000e+00> : vector<2x256xf32>
    %90 = tpu.matmul %86, %0, %cst_20 {dimension_numbers = #tpu.dot_dimension_numbers<[1], [0], [0], [1], [0, 0, 1, 1], [], []>} : vector<2x64xf32>, vector<64x256xf32>, vector<2x256xf32> -> vector<2x256xf32>
    %91 = arith.addf %89, %90 : vector<2x256xf32>
    %92 = vector.extract_strided_slice %91 {offsets = [0, 0], sizes = [2, 192], strides = [1, 1]} : vector<2x256xf32> to vector<2x192xf32>
    %93 = arith.negf %92 : vector<2x192xf32>
    %94 = math.exp %93 : vector<2x192xf32>
    %cst_21 = arith.constant 1.000000e+00 : f32
    %95 = vector.broadcast %cst_21 : f32 to vector<2x192xf32>
    %96 = arith.addf %95, %94 : vector<2x192xf32>
    %97 = arith.divf %95, %96 : vector<2x192xf32>
    %98 = vector.extract_strided_slice %91 {offsets = [0, 192], sizes = [2, 64], strides = [1, 1]} : vector<2x256xf32> to vector<2x64xf32>
    %99 = math.tanh %98 : vector<2x64xf32>
    %100 = vector.extract_strided_slice %97 {offsets = [0, 0], sizes = [2, 64], strides = [1, 1]} : vector<2x192xf32> to vector<2x64xf32>
    %101 = vector.extract_strided_slice %97 {offsets = [0, 64], sizes = [2, 64], strides = [1, 1]} : vector<2x192xf32> to vector<2x64xf32>
    %102 = vector.extract_strided_slice %97 {offsets = [0, 128], sizes = [2, 64], strides = [1, 1]} : vector<2x192xf32> to vector<2x64xf32>
    %103 = arith.mulf %101, %84 : vector<2x64xf32>
    %104 = arith.mulf %100, %99 : vector<2x64xf32>
    %105 = arith.addf %103, %104 : vector<2x64xf32>
    %106 = math.tanh %105 : vector<2x64xf32>
    %107 = arith.mulf %102, %106 : vector<2x64xf32>
    %c5_i32 = arith.constant 5 : i32
    %108 = arith.index_cast %c5_i32 : i32 to index
    %c0_22 = arith.constant 0 : index
    %c0_23 = arith.constant 0 : index
    %109 = vector.load %arg0[%108, %c0_22, %c0_23] : memref<15x2x256xf32, #tpu.memory_space<vmem>>, vector<1x2x256xf32>
    %110 = vector.shape_cast %109 : vector<1x2x256xf32> to vector<2x256xf32>
    %cst_24 = arith.constant dense<0.000000e+00> : vector<2x256xf32>
    %111 = tpu.matmul %107, %0, %cst_24 {dimension_numbers = #tpu.dot_dimension_numbers<[1], [0], [0], [1], [0, 0, 1, 1], [], []>} : vector<2x64xf32>, vector<64x256xf32>, vector<2x256xf32> -> vector<2x256xf32>
    %112 = arith.addf %110, %111 : vector<2x256xf32>
    %113 = vector.extract_strided_slice %112 {offsets = [0, 0], sizes = [2, 192], strides = [1, 1]} : vector<2x256xf32> to vector<2x192xf32>
    %114 = arith.negf %113 : vector<2x192xf32>
    %115 = math.exp %114 : vector<2x192xf32>
    %cst_25 = arith.constant 1.000000e+00 : f32
    %116 = vector.broadcast %cst_25 : f32 to vector<2x192xf32>
    %117 = arith.addf %116, %115 : vector<2x192xf32>
    %118 = arith.divf %116, %117 : vector<2x192xf32>
    %119 = vector.extract_strided_slice %112 {offsets = [0, 192], sizes = [2, 64], strides = [1, 1]} : vector<2x256xf32> to vector<2x64xf32>
    %120 = math.tanh %119 : vector<2x64xf32>
    %121 = vector.extract_strided_slice %118 {offsets = [0, 0], sizes = [2, 64], strides = [1, 1]} : vector<2x192xf32> to vector<2x64xf32>
    %122 = vector.extract_strided_slice %118 {offsets = [0, 64], sizes = [2, 64], strides = [1, 1]} : vector<2x192xf32> to vector<2x64xf32>
    %123 = vector.extract_strided_slice %118 {offsets = [0, 128], sizes = [2, 64], strides = [1, 1]} : vector<2x192xf32> to vector<2x64xf32>
    %124 = arith.mulf %122, %105 : vector<2x64xf32>
    %125 = arith.mulf %121, %120 : vector<2x64xf32>
    %126 = arith.addf %124, %125 : vector<2x64xf32>
    %127 = math.tanh %126 : vector<2x64xf32>
    %128 = arith.mulf %123, %127 : vector<2x64xf32>
    %c6_i32 = arith.constant 6 : i32
    %129 = arith.index_cast %c6_i32 : i32 to index
    %c0_26 = arith.constant 0 : index
    %c0_27 = arith.constant 0 : index
    %130 = vector.load %arg0[%129, %c0_26, %c0_27] : memref<15x2x256xf32, #tpu.memory_space<vmem>>, vector<1x2x256xf32>
    %131 = vector.shape_cast %130 : vector<1x2x256xf32> to vector<2x256xf32>
    %cst_28 = arith.constant dense<0.000000e+00> : vector<2x256xf32>
    %132 = tpu.matmul %128, %0, %cst_28 {dimension_numbers = #tpu.dot_dimension_numbers<[1], [0], [0], [1], [0, 0, 1, 1], [], []>} : vector<2x64xf32>, vector<64x256xf32>, vector<2x256xf32> -> vector<2x256xf32>
    %133 = arith.addf %131, %132 : vector<2x256xf32>
    %134 = vector.extract_strided_slice %133 {offsets = [0, 0], sizes = [2, 192], strides = [1, 1]} : vector<2x256xf32> to vector<2x192xf32>
    %135 = arith.negf %134 : vector<2x192xf32>
    %136 = math.exp %135 : vector<2x192xf32>
    %cst_29 = arith.constant 1.000000e+00 : f32
    %137 = vector.broadcast %cst_29 : f32 to vector<2x192xf32>
    %138 = arith.addf %137, %136 : vector<2x192xf32>
    %139 = arith.divf %137, %138 : vector<2x192xf32>
    %140 = vector.extract_strided_slice %133 {offsets = [0, 192], sizes = [2, 64], strides = [1, 1]} : vector<2x256xf32> to vector<2x64xf32>
    %141 = math.tanh %140 : vector<2x64xf32>
    %142 = vector.extract_strided_slice %139 {offsets = [0, 0], sizes = [2, 64], strides = [1, 1]} : vector<2x192xf32> to vector<2x64xf32>
    %143 = vector.extract_strided_slice %139 {offsets = [0, 64], sizes = [2, 64], strides = [1, 1]} : vector<2x192xf32> to vector<2x64xf32>
    %144 = vector.extract_strided_slice %139 {offsets = [0, 128], sizes = [2, 64], strides = [1, 1]} : vector<2x192xf32> to vector<2x64xf32>
    %145 = arith.mulf %143, %126 : vector<2x64xf32>
    %146 = arith.mulf %142, %141 : vector<2x64xf32>
    %147 = arith.addf %145, %146 : vector<2x64xf32>
    %148 = math.tanh %147 : vector<2x64xf32>
    %149 = arith.mulf %144, %148 : vector<2x64xf32>
    %c7_i32 = arith.constant 7 : i32
    %150 = arith.index_cast %c7_i32 : i32 to index
    %c0_30 = arith.constant 0 : index
    %c0_31 = arith.constant 0 : index
    %151 = vector.load %arg0[%150, %c0_30, %c0_31] : memref<15x2x256xf32, #tpu.memory_space<vmem>>, vector<1x2x256xf32>
    %152 = vector.shape_cast %151 : vector<1x2x256xf32> to vector<2x256xf32>
    %cst_32 = arith.constant dense<0.000000e+00> : vector<2x256xf32>
    %153 = tpu.matmul %149, %0, %cst_32 {dimension_numbers = #tpu.dot_dimension_numbers<[1], [0], [0], [1], [0, 0, 1, 1], [], []>} : vector<2x64xf32>, vector<64x256xf32>, vector<2x256xf32> -> vector<2x256xf32>
    %154 = arith.addf %152, %153 : vector<2x256xf32>
    %155 = vector.extract_strided_slice %154 {offsets = [0, 0], sizes = [2, 192], strides = [1, 1]} : vector<2x256xf32> to vector<2x192xf32>
    %156 = arith.negf %155 : vector<2x192xf32>
    %157 = math.exp %156 : vector<2x192xf32>
    %cst_33 = arith.constant 1.000000e+00 : f32
    %158 = vector.broadcast %cst_33 : f32 to vector<2x192xf32>
    %159 = arith.addf %158, %157 : vector<2x192xf32>
    %160 = arith.divf %158, %159 : vector<2x192xf32>
    %161 = vector.extract_strided_slice %154 {offsets = [0, 192], sizes = [2, 64], strides = [1, 1]} : vector<2x256xf32> to vector<2x64xf32>
    %162 = math.tanh %161 : vector<2x64xf32>
    %163 = vector.extract_strided_slice %160 {offsets = [0, 0], sizes = [2, 64], strides = [1, 1]} : vector<2x192xf32> to vector<2x64xf32>
    %164 = vector.extract_strided_slice %160 {offsets = [0, 64], sizes = [2, 64], strides = [1, 1]} : vector<2x192xf32> to vector<2x64xf32>
    %165 = vector.extract_strided_slice %160 {offsets = [0, 128], sizes = [2, 64], strides = [1, 1]} : vector<2x192xf32> to vector<2x64xf32>
    %166 = arith.mulf %164, %147 : vector<2x64xf32>
    %167 = arith.mulf %163, %162 : vector<2x64xf32>
    %168 = arith.addf %166, %167 : vector<2x64xf32>
    %169 = math.tanh %168 : vector<2x64xf32>
    %170 = arith.mulf %165, %169 : vector<2x64xf32>
    %c8_i32 = arith.constant 8 : i32
    %171 = arith.index_cast %c8_i32 : i32 to index
    %c0_34 = arith.constant 0 : index
    %c0_35 = arith.constant 0 : index
    %172 = vector.load %arg0[%171, %c0_34, %c0_35] : memref<15x2x256xf32, #tpu.memory_space<vmem>>, vector<1x2x256xf32>
    %173 = vector.shape_cast %172 : vector<1x2x256xf32> to vector<2x256xf32>
    %cst_36 = arith.constant dense<0.000000e+00> : vector<2x256xf32>
    %174 = tpu.matmul %170, %0, %cst_36 {dimension_numbers = #tpu.dot_dimension_numbers<[1], [0], [0], [1], [0, 0, 1, 1], [], []>} : vector<2x64xf32>, vector<64x256xf32>, vector<2x256xf32> -> vector<2x256xf32>
    %175 = arith.addf %173, %174 : vector<2x256xf32>
    %176 = vector.extract_strided_slice %175 {offsets = [0, 0], sizes = [2, 192], strides = [1, 1]} : vector<2x256xf32> to vector<2x192xf32>
    %177 = arith.negf %176 : vector<2x192xf32>
    %178 = math.exp %177 : vector<2x192xf32>
    %cst_37 = arith.constant 1.000000e+00 : f32
    %179 = vector.broadcast %cst_37 : f32 to vector<2x192xf32>
    %180 = arith.addf %179, %178 : vector<2x192xf32>
    %181 = arith.divf %179, %180 : vector<2x192xf32>
    %182 = vector.extract_strided_slice %175 {offsets = [0, 192], sizes = [2, 64], strides = [1, 1]} : vector<2x256xf32> to vector<2x64xf32>
    %183 = math.tanh %182 : vector<2x64xf32>
    %184 = vector.extract_strided_slice %181 {offsets = [0, 0], sizes = [2, 64], strides = [1, 1]} : vector<2x192xf32> to vector<2x64xf32>
    %185 = vector.extract_strided_slice %181 {offsets = [0, 64], sizes = [2, 64], strides = [1, 1]} : vector<2x192xf32> to vector<2x64xf32>
    %186 = vector.extract_strided_slice %181 {offsets = [0, 128], sizes = [2, 64], strides = [1, 1]} : vector<2x192xf32> to vector<2x64xf32>
    %187 = arith.mulf %185, %168 : vector<2x64xf32>
    %188 = arith.mulf %184, %183 : vector<2x64xf32>
    %189 = arith.addf %187, %188 : vector<2x64xf32>
    %190 = math.tanh %189 : vector<2x64xf32>
    %191 = arith.mulf %186, %190 : vector<2x64xf32>
    %c9_i32 = arith.constant 9 : i32
    %192 = arith.index_cast %c9_i32 : i32 to index
    %c0_38 = arith.constant 0 : index
    %c0_39 = arith.constant 0 : index
    %193 = vector.load %arg0[%192, %c0_38, %c0_39] : memref<15x2x256xf32, #tpu.memory_space<vmem>>, vector<1x2x256xf32>
    %194 = vector.shape_cast %193 : vector<1x2x256xf32> to vector<2x256xf32>
    %cst_40 = arith.constant dense<0.000000e+00> : vector<2x256xf32>
    %195 = tpu.matmul %191, %0, %cst_40 {dimension_numbers = #tpu.dot_dimension_numbers<[1], [0], [0], [1], [0, 0, 1, 1], [], []>} : vector<2x64xf32>, vector<64x256xf32>, vector<2x256xf32> -> vector<2x256xf32>
    %196 = arith.addf %194, %195 : vector<2x256xf32>
    %197 = vector.extract_strided_slice %196 {offsets = [0, 0], sizes = [2, 192], strides = [1, 1]} : vector<2x256xf32> to vector<2x192xf32>
    %198 = arith.negf %197 : vector<2x192xf32>
    %199 = math.exp %198 : vector<2x192xf32>
    %cst_41 = arith.constant 1.000000e+00 : f32
    %200 = vector.broadcast %cst_41 : f32 to vector<2x192xf32>
    %201 = arith.addf %200, %199 : vector<2x192xf32>
    %202 = arith.divf %200, %201 : vector<2x192xf32>
    %203 = vector.extract_strided_slice %196 {offsets = [0, 192], sizes = [2, 64], strides = [1, 1]} : vector<2x256xf32> to vector<2x64xf32>
    %204 = math.tanh %203 : vector<2x64xf32>
    %205 = vector.extract_strided_slice %202 {offsets = [0, 0], sizes = [2, 64], strides = [1, 1]} : vector<2x192xf32> to vector<2x64xf32>
    %206 = vector.extract_strided_slice %202 {offsets = [0, 64], sizes = [2, 64], strides = [1, 1]} : vector<2x192xf32> to vector<2x64xf32>
    %207 = vector.extract_strided_slice %202 {offsets = [0, 128], sizes = [2, 64], strides = [1, 1]} : vector<2x192xf32> to vector<2x64xf32>
    %208 = arith.mulf %206, %189 : vector<2x64xf32>
    %209 = arith.mulf %205, %204 : vector<2x64xf32>
    %210 = arith.addf %208, %209 : vector<2x64xf32>
    %211 = math.tanh %210 : vector<2x64xf32>
    %212 = arith.mulf %207, %211 : vector<2x64xf32>
    %c10_i32 = arith.constant 10 : i32
    %213 = arith.index_cast %c10_i32 : i32 to index
    %c0_42 = arith.constant 0 : index
    %c0_43 = arith.constant 0 : index
    %214 = vector.load %arg0[%213, %c0_42, %c0_43] : memref<15x2x256xf32, #tpu.memory_space<vmem>>, vector<1x2x256xf32>
    %215 = vector.shape_cast %214 : vector<1x2x256xf32> to vector<2x256xf32>
    %cst_44 = arith.constant dense<0.000000e+00> : vector<2x256xf32>
    %216 = tpu.matmul %212, %0, %cst_44 {dimension_numbers = #tpu.dot_dimension_numbers<[1], [0], [0], [1], [0, 0, 1, 1], [], []>} : vector<2x64xf32>, vector<64x256xf32>, vector<2x256xf32> -> vector<2x256xf32>
    %217 = arith.addf %215, %216 : vector<2x256xf32>
    %218 = vector.extract_strided_slice %217 {offsets = [0, 0], sizes = [2, 192], strides = [1, 1]} : vector<2x256xf32> to vector<2x192xf32>
    %219 = arith.negf %218 : vector<2x192xf32>
    %220 = math.exp %219 : vector<2x192xf32>
    %cst_45 = arith.constant 1.000000e+00 : f32
    %221 = vector.broadcast %cst_45 : f32 to vector<2x192xf32>
    %222 = arith.addf %221, %220 : vector<2x192xf32>
    %223 = arith.divf %221, %222 : vector<2x192xf32>
    %224 = vector.extract_strided_slice %217 {offsets = [0, 192], sizes = [2, 64], strides = [1, 1]} : vector<2x256xf32> to vector<2x64xf32>
    %225 = math.tanh %224 : vector<2x64xf32>
    %226 = vector.extract_strided_slice %223 {offsets = [0, 0], sizes = [2, 64], strides = [1, 1]} : vector<2x192xf32> to vector<2x64xf32>
    %227 = vector.extract_strided_slice %223 {offsets = [0, 64], sizes = [2, 64], strides = [1, 1]} : vector<2x192xf32> to vector<2x64xf32>
    %228 = vector.extract_strided_slice %223 {offsets = [0, 128], sizes = [2, 64], strides = [1, 1]} : vector<2x192xf32> to vector<2x64xf32>
    %229 = arith.mulf %227, %210 : vector<2x64xf32>
    %230 = arith.mulf %226, %225 : vector<2x64xf32>
    %231 = arith.addf %229, %230 : vector<2x64xf32>
    %232 = math.tanh %231 : vector<2x64xf32>
    %233 = arith.mulf %228, %232 : vector<2x64xf32>
    %c11_i32 = arith.constant 11 : i32
    %234 = arith.index_cast %c11_i32 : i32 to index
    %c0_46 = arith.constant 0 : index
    %c0_47 = arith.constant 0 : index
    %235 = vector.load %arg0[%234, %c0_46, %c0_47] : memref<15x2x256xf32, #tpu.memory_space<vmem>>, vector<1x2x256xf32>
    %236 = vector.shape_cast %235 : vector<1x2x256xf32> to vector<2x256xf32>
    %cst_48 = arith.constant dense<0.000000e+00> : vector<2x256xf32>
    %237 = tpu.matmul %233, %0, %cst_48 {dimension_numbers = #tpu.dot_dimension_numbers<[1], [0], [0], [1], [0, 0, 1, 1], [], []>} : vector<2x64xf32>, vector<64x256xf32>, vector<2x256xf32> -> vector<2x256xf32>
    %238 = arith.addf %236, %237 : vector<2x256xf32>
    %239 = vector.extract_strided_slice %238 {offsets = [0, 0], sizes = [2, 192], strides = [1, 1]} : vector<2x256xf32> to vector<2x192xf32>
    %240 = arith.negf %239 : vector<2x192xf32>
    %241 = math.exp %240 : vector<2x192xf32>
    %cst_49 = arith.constant 1.000000e+00 : f32
    %242 = vector.broadcast %cst_49 : f32 to vector<2x192xf32>
    %243 = arith.addf %242, %241 : vector<2x192xf32>
    %244 = arith.divf %242, %243 : vector<2x192xf32>
    %245 = vector.extract_strided_slice %238 {offsets = [0, 192], sizes = [2, 64], strides = [1, 1]} : vector<2x256xf32> to vector<2x64xf32>
    %246 = math.tanh %245 : vector<2x64xf32>
    %247 = vector.extract_strided_slice %244 {offsets = [0, 0], sizes = [2, 64], strides = [1, 1]} : vector<2x192xf32> to vector<2x64xf32>
    %248 = vector.extract_strided_slice %244 {offsets = [0, 64], sizes = [2, 64], strides = [1, 1]} : vector<2x192xf32> to vector<2x64xf32>
    %249 = vector.extract_strided_slice %244 {offsets = [0, 128], sizes = [2, 64], strides = [1, 1]} : vector<2x192xf32> to vector<2x64xf32>
    %250 = arith.mulf %248, %231 : vector<2x64xf32>
    %251 = arith.mulf %247, %246 : vector<2x64xf32>
    %252 = arith.addf %250, %251 : vector<2x64xf32>
    %253 = math.tanh %252 : vector<2x64xf32>
    %254 = arith.mulf %249, %253 : vector<2x64xf32>
    %c12_i32 = arith.constant 12 : i32
    %255 = arith.index_cast %c12_i32 : i32 to index
    %c0_50 = arith.constant 0 : index
    %c0_51 = arith.constant 0 : index
    %256 = vector.load %arg0[%255, %c0_50, %c0_51] : memref<15x2x256xf32, #tpu.memory_space<vmem>>, vector<1x2x256xf32>
    %257 = vector.shape_cast %256 : vector<1x2x256xf32> to vector<2x256xf32>
    %cst_52 = arith.constant dense<0.000000e+00> : vector<2x256xf32>
    %258 = tpu.matmul %254, %0, %cst_52 {dimension_numbers = #tpu.dot_dimension_numbers<[1], [0], [0], [1], [0, 0, 1, 1], [], []>} : vector<2x64xf32>, vector<64x256xf32>, vector<2x256xf32> -> vector<2x256xf32>
    %259 = arith.addf %257, %258 : vector<2x256xf32>
    %260 = vector.extract_strided_slice %259 {offsets = [0, 0], sizes = [2, 192], strides = [1, 1]} : vector<2x256xf32> to vector<2x192xf32>
    %261 = arith.negf %260 : vector<2x192xf32>
    %262 = math.exp %261 : vector<2x192xf32>
    %cst_53 = arith.constant 1.000000e+00 : f32
    %263 = vector.broadcast %cst_53 : f32 to vector<2x192xf32>
    %264 = arith.addf %263, %262 : vector<2x192xf32>
    %265 = arith.divf %263, %264 : vector<2x192xf32>
    %266 = vector.extract_strided_slice %259 {offsets = [0, 192], sizes = [2, 64], strides = [1, 1]} : vector<2x256xf32> to vector<2x64xf32>
    %267 = math.tanh %266 : vector<2x64xf32>
    %268 = vector.extract_strided_slice %265 {offsets = [0, 0], sizes = [2, 64], strides = [1, 1]} : vector<2x192xf32> to vector<2x64xf32>
    %269 = vector.extract_strided_slice %265 {offsets = [0, 64], sizes = [2, 64], strides = [1, 1]} : vector<2x192xf32> to vector<2x64xf32>
    %270 = vector.extract_strided_slice %265 {offsets = [0, 128], sizes = [2, 64], strides = [1, 1]} : vector<2x192xf32> to vector<2x64xf32>
    %271 = arith.mulf %269, %252 : vector<2x64xf32>
    %272 = arith.mulf %268, %267 : vector<2x64xf32>
    %273 = arith.addf %271, %272 : vector<2x64xf32>
    %274 = math.tanh %273 : vector<2x64xf32>
    %275 = arith.mulf %270, %274 : vector<2x64xf32>
    %c13_i32 = arith.constant 13 : i32
    %276 = arith.index_cast %c13_i32 : i32 to index
    %c0_54 = arith.constant 0 : index
    %c0_55 = arith.constant 0 : index
    %277 = vector.load %arg0[%276, %c0_54, %c0_55] : memref<15x2x256xf32, #tpu.memory_space<vmem>>, vector<1x2x256xf32>
    %278 = vector.shape_cast %277 : vector<1x2x256xf32> to vector<2x256xf32>
    %cst_56 = arith.constant dense<0.000000e+00> : vector<2x256xf32>
    %279 = tpu.matmul %275, %0, %cst_56 {dimension_numbers = #tpu.dot_dimension_numbers<[1], [0], [0], [1], [0, 0, 1, 1], [], []>} : vector<2x64xf32>, vector<64x256xf32>, vector<2x256xf32> -> vector<2x256xf32>
    %280 = arith.addf %278, %279 : vector<2x256xf32>
    %281 = vector.extract_strided_slice %280 {offsets = [0, 0], sizes = [2, 192], strides = [1, 1]} : vector<2x256xf32> to vector<2x192xf32>
    %282 = arith.negf %281 : vector<2x192xf32>
    %283 = math.exp %282 : vector<2x192xf32>
    %cst_57 = arith.constant 1.000000e+00 : f32
    %284 = vector.broadcast %cst_57 : f32 to vector<2x192xf32>
    %285 = arith.addf %284, %283 : vector<2x192xf32>
    %286 = arith.divf %284, %285 : vector<2x192xf32>
    %287 = vector.extract_strided_slice %280 {offsets = [0, 192], sizes = [2, 64], strides = [1, 1]} : vector<2x256xf32> to vector<2x64xf32>
    %288 = math.tanh %287 : vector<2x64xf32>
    %289 = vector.extract_strided_slice %286 {offsets = [0, 0], sizes = [2, 64], strides = [1, 1]} : vector<2x192xf32> to vector<2x64xf32>
    %290 = vector.extract_strided_slice %286 {offsets = [0, 64], sizes = [2, 64], strides = [1, 1]} : vector<2x192xf32> to vector<2x64xf32>
    %291 = vector.extract_strided_slice %286 {offsets = [0, 128], sizes = [2, 64], strides = [1, 1]} : vector<2x192xf32> to vector<2x64xf32>
    %292 = arith.mulf %290, %273 : vector<2x64xf32>
    %293 = arith.mulf %289, %288 : vector<2x64xf32>
    %294 = arith.addf %292, %293 : vector<2x64xf32>
    %295 = math.tanh %294 : vector<2x64xf32>
    %296 = arith.mulf %291, %295 : vector<2x64xf32>
    %c14_i32 = arith.constant 14 : i32
    %297 = arith.index_cast %c14_i32 : i32 to index
    %c0_58 = arith.constant 0 : index
    %c0_59 = arith.constant 0 : index
    %298 = vector.load %arg0[%297, %c0_58, %c0_59] : memref<15x2x256xf32, #tpu.memory_space<vmem>>, vector<1x2x256xf32>
    %299 = vector.shape_cast %298 : vector<1x2x256xf32> to vector<2x256xf32>
    %cst_60 = arith.constant dense<0.000000e+00> : vector<2x256xf32>
    %300 = tpu.matmul %296, %0, %cst_60 {dimension_numbers = #tpu.dot_dimension_numbers<[1], [0], [0], [1], [0, 0, 1, 1], [], []>} : vector<2x64xf32>, vector<64x256xf32>, vector<2x256xf32> -> vector<2x256xf32>
    %301 = arith.addf %299, %300 : vector<2x256xf32>
    %302 = vector.extract_strided_slice %301 {offsets = [0, 0], sizes = [2, 192], strides = [1, 1]} : vector<2x256xf32> to vector<2x192xf32>
    %303 = arith.negf %302 : vector<2x192xf32>
    %304 = math.exp %303 : vector<2x192xf32>
    %cst_61 = arith.constant 1.000000e+00 : f32
    %305 = vector.broadcast %cst_61 : f32 to vector<2x192xf32>
    %306 = arith.addf %305, %304 : vector<2x192xf32>
    %307 = arith.divf %305, %306 : vector<2x192xf32>
    %308 = vector.extract_strided_slice %301 {offsets = [0, 192], sizes = [2, 64], strides = [1, 1]} : vector<2x256xf32> to vector<2x64xf32>
    %309 = math.tanh %308 : vector<2x64xf32>
    %310 = vector.extract_strided_slice %307 {offsets = [0, 0], sizes = [2, 64], strides = [1, 1]} : vector<2x192xf32> to vector<2x64xf32>
    %311 = vector.extract_strided_slice %307 {offsets = [0, 64], sizes = [2, 64], strides = [1, 1]} : vector<2x192xf32> to vector<2x64xf32>
    %312 = vector.extract_strided_slice %307 {offsets = [0, 128], sizes = [2, 64], strides = [1, 1]} : vector<2x192xf32> to vector<2x64xf32>
    %313 = arith.mulf %311, %294 : vector<2x64xf32>
    %314 = arith.mulf %310, %309 : vector<2x64xf32>
    %315 = arith.addf %313, %314 : vector<2x64xf32>
    %316 = math.tanh %315 : vector<2x64xf32>
    %317 = arith.mulf %312, %316 : vector<2x64xf32>
    %c15_i32 = arith.constant 15 : i32
    %c0_62 = arith.constant 0 : index
    %c0_63 = arith.constant 0 : index
    %318 = vector.load %arg2[%c0_62, %c0_63] : memref<64x1xf32, #tpu.memory_space<vmem>>, vector<64x1xf32>
    %cst_64 = arith.constant dense<0.000000e+00> : vector<2x1xf32>
    %319 = tpu.matmul %317, %318, %cst_64 {dimension_numbers = #tpu.dot_dimension_numbers<[1], [0], [0], [1], [0, 0, 1, 1], [], []>} : vector<2x64xf32>, vector<64x1xf32>, vector<2x1xf32> -> vector<2x1xf32>
    %c0_65 = arith.constant 0 : index
    %c0_66 = arith.constant 0 : index
    %320 = vector.load %arg3[%c0_65, %c0_66] : memref<1x1xf32, #tpu.memory_space<vmem>>, vector<1x1xf32>
    %321 = vector.broadcast %320 : vector<1x1xf32> to vector<2x1xf32>
    %322 = arith.addf %319, %321 : vector<2x1xf32>
    %c0_67 = arith.constant 0 : index
    %c0_68 = arith.constant 0 : index
    %323 = vector.load %arg4[%c0_67, %c0_68] : memref<2x1xf32, #tpu.memory_space<vmem>>, vector<2x1xf32>
    tpu.vector_store %arg4[%c0_67, %c0_68], %322 {strides = array<i32>} : memref<2x1xf32, #tpu.memory_space<vmem>>, vector<2x1xf32>,
    return
  }
}

</mosaic_0001>

<llo_original>
// kernel: tpu_custom_call.1
$region0: #{tpu_custom_call.1}
  #allocation0 [shape = 'u32[]', space=smem, size = 0x4, offset = 0x4, fixed_abs, tag = 'smem constant byte address 0x4 - core index']
  #allocation1 [shape = 'u32[144,128]{1,0:T(1,128)}', space=vmem, size = 0x12000, scoped, tag = 'internal scratch']
  #allocation2 [shape = 'f32[1,1]{1,0:T(1,128)S(1)}', space=vmem, size = 0x200, scoped, tag = 'scoped memory for tpu_custom_call.1']
  %s0 = inlined_call_operand.vmem [shape: f32[15,2,256], index: 0, kind: input, shape index: {}]
  %s1 = inlined_call_operand.hbm [shape: f32[64,256], index: 1, kind: input, shape index: {}]
  %s2 = inlined_call_operand.vmem [shape: f32[64,1], index: 2, kind: input, shape index: {}]
  %s3 = inlined_call_operand.<no memory space> [shape: f32[1,1], index: 3, kind: input, shape index: {}]
  %s4 = inlined_call_operand.vmem [shape: f32[2,1], index: 4, kind: output, shape index: {}]
  %s5 = sld [smem:[#allocation0]]
  $region30: #{tpu_custom_call.1} parent=0
    _
  %s7 = ssub.s32 1, %s5
  %s8 = scalar_select 0, %s7, %s5
  %v9 = vstv %s3
  %10 = vst [vmem:[#allocation2] sm:$0x1] %v9
  $region1: #{tpu_custom_call.1} parent=0
    #allocation3 [shape = 'u8[65536]{0}', space=vmem, size = 0x10000, scoped, tag = 'input window, operand 1, single buffered']
    #allocation4 [shape = 's32[1]{0}', space=sflag, size = 0x4, scoped, tag = 'scoped memory for tpu_custom_call.1']
    %11 = vsyncpa [#allocation4], 0
    // Predicated region
    $region2: #{tpu_custom_call.1} parent=1 // pred_check
      _
    $region3: #{tpu_custom_call.1} parent=1 // pred_check_branch
      %13 = sbr.rel (0) target = $region5
    $region4: #{tpu_custom_call.1} parent=1 // pred_region
      _
    $region5: #{tpu_custom_call.1} parent=1 // pred_fallthru
      _
    // Predicated region
    $region6: #{tpu_custom_call.1} parent=1 // pred_check
      _
    $region7: #{tpu_custom_call.1} parent=1 // pred_check_branch
      %15 = sbr.rel (0) target = $region9
    $region8: #{tpu_custom_call.1} parent=1 // pred_region
      %s17 = ssub.s32 2048, 2048
      %18 = vsyncadd [#allocation4], %s17
      %s19 = sshll.u32 [#allocation3], 4
      %s20 = int_to_ptr.vmem [resolvable:$true] %s19
      %25 = dma.hbm_to_vmem [thread:$0]  %s1, 2048, %s20, [#allocation4], 256, 256, 16
    $region9: #{tpu_custom_call.1} parent=1 // pred_fallthru
      _
    // Predicated region
    $region10: #{tpu_custom_call.1} parent=1 // pred_check
      _
    $region11: #{tpu_custom_call.1} parent=1 // pred_check_branch
      %27 = sbr.rel (0) target = $region13
    $region12: #{tpu_custom_call.1} parent=1 // pred_region
      _
    $region13: #{tpu_custom_call.1} parent=1 // pred_fallthru
      _
    // Predicated region
    $region14: #{tpu_custom_call.1} parent=1 // pred_check
      _
    $region15: #{tpu_custom_call.1} parent=1 // pred_check_branch
      %29 = sbr.rel (0) target = $region17
    $region16: #{tpu_custom_call.1} parent=1 // pred_region
      _
    $region17: #{tpu_custom_call.1} parent=1 // pred_fallthru
      _
    // Predicated region
    $region18: #{tpu_custom_call.1} parent=1 // pred_check
      _
    $region19: #{tpu_custom_call.1} parent=1 // pred_check_branch
      %31 = sbr.rel (0) target = $region21
    $region20: #{tpu_custom_call.1} parent=1 // pred_region
      %32 = dma.done [#allocation4], 2048
    $region21: #{tpu_custom_call.1} parent=1 // pred_fallthru
      _
    %v33 = vld [vmem:[#allocation3] sm:$0xff]
    %v34 = vld [vmem:[#allocation3 + $0x8] sm:$0xff]
    %v35 = vld [vmem:[#allocation3 + $0x10] sm:$0xff]
    %v36 = vld [vmem:[#allocation3 + $0x18] sm:$0xff]
    %v37 = vld [vmem:[#allocation3 + $0x20] sm:$0xff]
    %v38 = vld [vmem:[#allocation3 + $0x28] sm:$0xff]
    %v39 = vld [vmem:[#allocation3 + $0x30] sm:$0xff]
    %v40 = vld [vmem:[#allocation3 + $0x38] sm:$0xff]
    %v41 = vld [vmem:[#allocation3 + $0x40] sm:$0xff]
    %v42 = vld [vmem:[#allocation3 + $0x48] sm:$0xff]
    %v43 = vld [vmem:[#allocation3 + $0x50] sm:$0xff]
    %v44 = vld [vmem:[#allocation3 + $0x58] sm:$0xff]
    %v45 = vld [vmem:[#allocation3 + $0x60] sm:$0xff]
    %v46 = vld [vmem:[#allocation3 + $0x68] sm:$0xff]
    %v47 = vld [vmem:[#allocation3 + $0x70] sm:$0xff]
    %v48 = vld [vmem:[#allocation3 + $0x78] sm:$0xff]
    %v49 = vld [vmem:[%s0] sm:$0xf]
    %vm50 = vcmask 523264
    %v52 = vsel %vm50, 0.0, 0
    %54 = vmatprep.subr.mxu0 %v34
    %55 = vmatpush1.msra.mxu0 %v33
    %56 = vmatprep.subr.mxu0 %v36
    %57 = vmatpush1.msra.mxu0 %v35
    %58 = vmatprep.subr.mxu0 %v38
    %59 = vmatpush1.msra.mxu0 %v37
    %60 = vmatprep.subr.mxu0 %v40
    %61 = vmatpush1.msra.mxu0 %v39
    %62 = vmatprep.subr.mxu0 %v42
    %63 = vmatpush1.msra.mxu0 %v41
    %64 = vmatprep.subr.mxu0 %v44
    %65 = vmatpush1.msra.mxu0 %v43
    %66 = vmatprep.subr.mxu0 %v46
    %67 = vmatpush1.msra.mxu0 %v45
    %68 = vmatprep.subr.mxu0 %v48
    %69 = vmatpush1.msra.mxu0 %v47
    %70 = vmatprep.subr.mxu0 0.0
    %71 = vmatpush1.msra.mxu0 0.0
    %72 = vmatprep.subr.mxu0 0.0
    %73 = vmatpush1.msra.mxu0 0.0
    %74 = vmatprep.subr.mxu0 0.0
    %75 = vmatpush1.msra.mxu0 0.0
    %76 = vmatprep.subr.mxu0 0.0
    %77 = vmatpush1.msra.mxu0 0.0
    %78 = vmatprep.subr.mxu0 0.0
    %79 = vmatpush1.msra.mxu0 0.0
    %80 = vmatprep.subr.mxu0 0.0
    %81 = vmatpush1.msra.mxu0 0.0
    %82 = vmatprep.subr.mxu0 0.0
    %83 = vmatpush1.msra.mxu0 0.0
    %84 = vmatprep.subr.mxu0 0.0
    %85 = vmatpush1.msra.mxu0 0.0
    %86 = vmatprep.subr.mxu0 0.0
    %87 = vmatpush1.msra.mxu0 0.0
    %88 = vmatprep.subr.mxu0 0.0
    %89 = vmatpush1.msra.mxu0 0.0
    %90 = vmatprep.subr.mxu0 0.0
    %91 = vmatpush1.msra.mxu0 0.0
    %92 = vmatprep.subr.mxu0 0.0
    %93 = vmatpush1.msra.mxu0 0.0
    %94 = vmatprep.subr.mxu0 0.0
    %95 = vmatpush1.msra.mxu0 0.0
    %96 = vmatprep.subr.mxu0 0.0
    %97 = vmatpush1.msra.mxu0 0.0
    %98 = vmatprep.subr.mxu0 0.0
    %99 = vmatpush1.msra.mxu0 0.0
    %100 = vmatprep.subr.mxu0 0.0
    %101 = vmatpush1.msra.mxu0 0.0
    %102 = vmatprep.subr.mxu0 0.0
    %103 = vmatpush1.msra.mxu0 0.0
    %104 = vmatprep.subr.mxu0 0.0
    %105 = vmatpush1.msra.mxu0 0.0
    %106 = vmatprep.subr.mxu0 0.0
    %107 = vmatpush1.msra.mxu0 0.0
    %108 = vmatprep.subr.mxu0 0.0
    %109 = vmatpush1.msra.mxu0 0.0
    %110 = vmatprep.subr.mxu0 0.0
    %111 = vmatpush1.msra.mxu0 0.0
    %112 = vmatprep.subr.mxu0 0.0
    %113 = vmatpush1.msra.mxu0 0.0
    %114 = vmatprep.subr.mxu0 0.0
    %115 = vmatpush1.msra.mxu0 0.0
    %116 = vmatprep.subr.mxu0 0.0
    %117 = vmatpush1.msra.mxu0 0.0
    %118 = vmatprep.mubr.f32.mxu0 0.0
    %119 = vmatmul.mubr.f32.gmra.mrb[0].mxu0 %v52
    %v120 = vpop.f32.mrb[0].mxu0
    %v121 = vadd.f32 0.0, %v120
    %v122 = vpop.f32.mrb[0].mxu0
    %v123 = vadd.f32 0.0, %v122
    %124 = vdwg.mxu0
    %v127 = vcombine.low %v121, %v123
    %v129 = vunpack.c.l.s4 1983009808
    %v130 = vunpack.c.0.s8 %v129
    %v131 = vlaneseq
    %v132 = vshrl.u32 %v131, 7
    %v133 = vsub.s32 %v130, %v132
    %v134 = vrot.slane %v127, %v133
    %v136 = vadd.f32 %v49, %v134
    %v137 = vxor.u32 %v136, 2147483648
    %v138 = vmul.f32 %v137, 1.442695
    %v139 = vpow.pop %v138
    %v140 = vadd.f32 %v139, 1.0
    %v141 = vrcp.pop %v140
    %v142 = vmul.f32 1.0, %v141
    %144 = vrot.lane.b32.xlu0 %v136, 64
    %v145 = vpop.permute.xlu0 %144
    %v146 = vrot.slane %v145, 2
    %v148 = vtanh.pop %v146
    %v149 = vmul.f32 %v142, 0.0
    %v150 = vmul.f32 %v142, %v148
    %152 = vrot.lane.b32.xlu0 %v150, 64
    %v153 = vpop.permute.xlu0 %152
    %v155 = vadd.f32 %v149, %v153
    %v156 = vtanh.pop %v155
    %v158 = vrot.slane %v142, 2
    %161 = vrot.lane.b32.xlu0 %v156, 64
    %v162 = vpop.permute.xlu0 %161
    %v164 = vmul.f32 %v158, %v162
    %s165 = scalar_lea.vmem %s0, 4
    %v166 = vld [vmem:[%s165] sm:$0xf]
    %v168 = vsel %vm50, %v164, 0
    %170 = vmatprep.subr.mxu0 %v34
    %171 = vmatpush1.msra.mxu0 %v33
    %172 = vmatprep.subr.mxu0 %v36
    %173 = vmatpush1.msra.mxu0 %v35
    %174 = vmatprep.subr.mxu0 %v38
    %175 = vmatpush1.msra.mxu0 %v37
    %176 = vmatprep.subr.mxu0 %v40
    %177 = vmatpush1.msra.mxu0 %v39
    %178 = vmatprep.subr.mxu0 %v42
    %179 = vmatpush1.msra.mxu0 %v41
    %180 = vmatprep.subr.mxu0 %v44
    %181 = vmatpush1.msra.mxu0 %v43
    %182 = vmatprep.subr.mxu0 %v46
    %183 = vmatpush1.msra.mxu0 %v45
    %184 = vmatprep.subr.mxu0 %v48
    %185 = vmatpush1.msra.mxu0 %v47
    %186 = vmatprep.subr.mxu0 0.0
    %187 = vmatpush1.msra.mxu0 0.0
    %188 = vmatprep.subr.mxu0 0.0
    %189 = vmatpush1.msra.mxu0 0.0
    %190 = vmatprep.subr.mxu0 0.0
    %191 = vmatpush1.msra.mxu0 0.0
    %192 = vmatprep.subr.mxu0 0.0
    %193 = vmatpush1.msra.mxu0 0.0
    %194 = vmatprep.subr.mxu0 0.0
    %195 = vmatpush1.msra.mxu0 0.0
    %196 = vmatprep.subr.mxu0 0.0
    %197 = vmatpush1.msra.mxu0 0.0
    %198 = vmatprep.subr.mxu0 0.0
    %199 = vmatpush1.msra.mxu0 0.0
    %200 = vmatprep.subr.mxu0 0.0
    %201 = vmatpush1.msra.mxu0 0.0
    %202 = vmatprep.subr.mxu0 0.0
    %203 = vmatpush1.msra.mxu0 0.0
    %204 = vmatprep.subr.mxu0 0.0
    %205 = vmatpush1.msra.mxu0 0.0
    %206 = vmatprep.subr.mxu0 0.0
    %207 = vmatpush1.msra.mxu0 0.0
    %208 = vmatprep.subr.mxu0 0.0
    %209 = vmatpush1.msra.mxu0 0.0
    %210 = vmatprep.subr.mxu0 0.0
    %211 = vmatpush1.msra.mxu0 0.0
    %212 = vmatprep.subr.mxu0 0.0
    %213 = vmatpush1.msra.mxu0 0.0
    %214 = vmatprep.subr.mxu0 0.0
    %215 = vmatpush1.msra.mxu0 0.0
    %216 = vmatprep.subr.mxu0 0.0
    %217 = vmatpush1.msra.mxu0 0.0
    %218 = vmatprep.subr.mxu0 0.0
    %219 = vmatpush1.msra.mxu0 0.0
    %220 = vmatprep.subr.mxu0 0.0
    %221 = vmatpush1.msra.mxu0 0.0
    %222 = vmatprep.subr.mxu0 0.0
    %223 = vmatpush1.msra.mxu0 0.0
    %224 = vmatprep.subr.mxu0 0.0
    %225 = vmatpush1.msra.mxu0 0.0
    %226 = vmatprep.subr.mxu0 0.0
    %227 = vmatpush1.msra.mxu0 0.0
    %228 = vmatprep.subr.mxu0 0.0
    %229 = vmatpush1.msra.mxu0 0.0
    %230 = vmatprep.subr.mxu0 0.0
    %231 = vmatpush1.msra.mxu0 0.0
    %232 = vmatprep.subr.mxu0 0.0
    %233 = vmatpush1.msra.mxu0 0.0
    %234 = vmatprep.mubr.f32.mxu0 0.0
    %235 = vmatmul.mubr.f32.gmra.mrb[0].mxu0 %v168
    %v236 = vpop.f32.mrb[0].mxu0
    %v237 = vadd.f32 0.0, %v236
    %v238 = vpop.f32.mrb[0].mxu0
    %v239 = vadd.f32 0.0, %v238
    %240 = vdwg.mxu0
    %v243 = vcombine.low %v237, %v239
    %v245 = vunpack.c.l.s4 1983009808
    %v246 = vunpack.c.0.s8 %v245
    %v247 = vlaneseq
    %v248 = vshrl.u32 %v247, 7
    %v249 = vsub.s32 %v246, %v248
    %v250 = vrot.slane %v243, %v249
    %v252 = vadd.f32 %v166, %v250
    %v253 = vxor.u32 %v252, 2147483648
    %v254 = vmul.f32 %v253, 1.442695
    %v255 = vpow.pop %v254
    %v256 = vadd.f32 %v255, 1.0
    %v257 = vrcp.pop %v256
    %v258 = vmul.f32 1.0, %v257
    %260 = vrot.lane.b32.xlu0 %v252, 64
    %v261 = vpop.permute.xlu0 %260
    %v262 = vrot.slane %v261, 2
    %v264 = vtanh.pop %v262
    %v265 = vmul.f32 %v258, %v155
    %v266 = vmul.f32 %v258, %v264
    %268 = vrot.lane.b32.xlu0 %v266, 64
    %v269 = vpop.permute.xlu0 %268
    %v271 = vadd.f32 %v265, %v269
    %v272 = vtanh.pop %v271
    %v274 = vrot.slane %v258, 2
    %277 = vrot.lane.b32.xlu0 %v272, 64
    %v278 = vpop.permute.xlu0 %277
    %v280 = vmul.f32 %v274, %v278
    %s281 = scalar_lea.vmem %s0, 8
    %v282 = vld [vmem:[%s281] sm:$0xf]
    %v284 = vsel %vm50, %v280, 0
    %286 = vmatprep.subr.mxu0 %v34
    %287 = vmatpush1.msra.mxu0 %v33
    %288 = vmatprep.subr.mxu0 %v36
    %289 = vmatpush1.msra.mxu0 %v35
    %290 = vmatprep.subr.mxu0 %v38
    %291 = vmatpush1.msra.mxu0 %v37
    %292 = vmatprep.subr.mxu0 %v40
    %293 = vmatpush1.msra.mxu0 %v39
    %294 = vmatprep.subr.mxu0 %v42
    %295 = vmatpush1.msra.mxu0 %v41
    %296 = vmatprep.subr.mxu0 %v44
    %297 = vmatpush1.msra.mxu0 %v43
    %298 = vmatprep.subr.mxu0 %v46
    %299 = vmatpush1.msra.mxu0 %v45
    %300 = vmatprep.subr.mxu0 %v48
    %301 = vmatpush1.msra.mxu0 %v47
    %302 = vmatprep.subr.mxu0 0.0
    %303 = vmatpush1.msra.mxu0 0.0
    %304 = vmatprep.subr.mxu0 0.0
    %305 = vmatpush1.msra.mxu0 0.0
    %306 = vmatprep.subr.mxu0 0.0
    %307 = vmatpush1.msra.mxu0 0.0
    %308 = vmatprep.subr.mxu0 0.0
    %309 = vmatpush1.msra.mxu0 0.0
    %310 = vmatprep.subr.mxu0 0.0
    %311 = vmatpush1.msra.mxu0 0.0
    %312 = vmatprep.subr.mxu0 0.0
    %313 = vmatpush1.msra.mxu0 0.0
    %314 = vmatprep.subr.mxu0 0.0
    %315 = vmatpush1.msra.mxu0 0.0
    %316 = vmatprep.subr.mxu0 0.0
    %317 = vmatpush1.msra.mxu0 0.0
    %318 = vmatprep.subr.mxu0 0.0
    %319 = vmatpush1.msra.mxu0 0.0
    %320 = vmatprep.subr.mxu0 0.0
    %321 = vmatpush1.msra.mxu0 0.0
    %322 = vmatprep.subr.mxu0 0.0
    %323 = vmatpush1.msra.mxu0 0.0
    %324 = vmatprep.subr.mxu0 0.0
    %325 = vmatpush1.msra.mxu0 0.0
    %326 = vmatprep.subr.mxu0 0.0
    %327 = vmatpush1.msra.mxu0 0.0
    %328 = vmatprep.subr.mxu0 0.0
    %329 = vmatpush1.msra.mxu0 0.0
    %330 = vmatprep.subr.mxu0 0.0
    %331 = vmatpush1.msra.mxu0 0.0
    %332 = vmatprep.subr.mxu0 0.0
    %333 = vmatpush1.msra.mxu0 0.0
    %334 = vmatprep.subr.mxu0 0.0
    %335 = vmatpush1.msra.mxu0 0.0
    %336 = vmatprep.subr.mxu0 0.0
    %337 = vmatpush1.msra.mxu0 0.0
    %338 = vmatprep.subr.mxu0 0.0
    %339 = vmatpush1.msra.mxu0 0.0
    %340 = vmatprep.subr.mxu0 0.0
    %341 = vmatpush1.msra.mxu0 0.0
    %342 = vmatprep.subr.mxu0 0.0
    %343 = vmatpush1.msra.mxu0 0.0
    %344 = vmatprep.subr.mxu0 0.0
    %345 = vmatpush1.msra.mxu0 0.0
    %346 = vmatprep.subr.mxu0 0.0
    %347 = vmatpush1.msra.mxu0 0.0
    %348 = vmatprep.subr.mxu0 0.0
    %349 = vmatpush1.msra.mxu0 0.0
    %350 = vmatprep.mubr.f32.mxu0 0.0
    %351 = vmatmul.mubr.f32.gmra.mrb[0].mxu0 %v284
    %v352 = vpop.f32.mrb[0].mxu0
    %v353 = vadd.f32 0.0, %v352
    %v354 = vpop.f32.mrb[0].mxu0
    %v355 = vadd.f32 0.0, %v354
    %356 = vdwg.mxu0
    %v359 = vcombine.low %v353, %v355
    %v361 = vunpack.c.l.s4 1983009808
    %v362 = vunpack.c.0.s8 %v361
    %v363 = vlaneseq
    %v364 = vshrl.u32 %v363, 7
    %v365 = vsub.s32 %v362, %v364
    %v366 = vrot.slane %v359, %v365
    %v368 = vadd.f32 %v282, %v366
    %v369 = vxor.u32 %v368, 2147483648
    %v370 = vmul.f32 %v369, 1.442695
    %v371 = vpow.pop %v370
    %v372 = vadd.f32 %v371, 1.0
    %v373 = vrcp.pop %v372
    %v374 = vmul.f32 1.0, %v373
    %376 = vrot.lane.b32.xlu0 %v368, 64
    %v377 = vpop.permute.xlu0 %376
    %v378 = vrot.slane %v377, 2
    %v380 = vtanh.pop %v378
    %v381 = vmul.f32 %v374, %v271
    %v382 = vmul.f32 %v374, %v380
    %384 = vrot.lane.b32.xlu0 %v382, 64
    %v385 = vpop.permute.xlu0 %384
    %v387 = vadd.f32 %v381, %v385
    %v388 = vtanh.pop %v387
    %v390 = vrot.slane %v374, 2
    %393 = vrot.lane.b32.xlu0 %v388, 64
    %v394 = vpop.permute.xlu0 %393
    %v396 = vmul.f32 %v390, %v394
    %s397 = scalar_lea.vmem %s0, 12
    %v398 = vld [vmem:[%s397] sm:$0xf]
    %v400 = vsel %vm50, %v396, 0
    %402 = vmatprep.subr.mxu0 %v34
    %403 = vmatpush1.msra.mxu0 %v33
    %404 = vmatprep.subr.mxu0 %v36
    %405 = vmatpush1.msra.mxu0 %v35
    %406 = vmatprep.subr.mxu0 %v38
    %407 = vmatpush1.msra.mxu0 %v37
    %408 = vmatprep.subr.mxu0 %v40
    %409 = vmatpush1.msra.mxu0 %v39
    %410 = vmatprep.subr.mxu0 %v42
    %411 = vmatpush1.msra.mxu0 %v41
    %412 = vmatprep.subr.mxu0 %v44
    %413 = vmatpush1.msra.mxu0 %v43
    %414 = vmatprep.subr.mxu0 %v46
    %415 = vmatpush1.msra.mxu0 %v45
    %416 = vmatprep.subr.mxu0 %v48
    %417 = vmatpush1.msra.mxu0 %v47
    %418 = vmatprep.subr.mxu0 0.0
    %419 = vmatpush1.msra.mxu0 0.0
    %420 = vmatprep.subr.mxu0 0.0
    %421 = vmatpush1.msra.mxu0 0.0
    %422 = vmatprep.subr.mxu0 0.0
    %423 = vmatpush1.msra.mxu0 0.0
    %424 = vmatprep.subr.mxu0 0.0
    %425 = vmatpush1.msra.mxu0 0.0
    %426 = vmatprep.subr.mxu0 0.0
    %427 = vmatpush1.msra.mxu0 0.0
    %428 = vmatprep.subr.mxu0 0.0
    %429 = vmatpush1.msra.mxu0 0.0
    %430 = vmatprep.subr.mxu0 0.0
    %431 = vmatpush1.msra.mxu0 0.0
    %432 = vmatprep.subr.mxu0 0.0
    %433 = vmatpush1.msra.mxu0 0.0
    %434 = vmatprep.subr.mxu0 0.0
    %435 = vmatpush1.msra.mxu0 0.0
    %436 = vmatprep.subr.mxu0 0.0
    %437 = vmatpush1.msra.mxu0 0.0
    %438 = vmatprep.subr.mxu0 0.0
    %439 = vmatpush1.msra.mxu0 0.0
    %440 = vmatprep.subr.mxu0 0.0
    %441 = vmatpush1.msra.mxu0 0.0
    %442 = vmatprep.subr.mxu0 0.0
    %443 = vmatpush1.msra.mxu0 0.0
    %444 = vmatprep.subr.mxu0 0.0
    %445 = vmatpush1.msra.mxu0 0.0
    %446 = vmatprep.subr.mxu0 0.0
    %447 = vmatpush1.msra.mxu0 0.0
    %448 = vmatprep.subr.mxu0 0.0
    %449 = vmatpush1.msra.mxu0 0.0
    %450 = vmatprep.subr.mxu0 0.0
    %451 = vmatpush1.msra.mxu0 0.0
    %452 = vmatprep.subr.mxu0 0.0
    %453 = vmatpush1.msra.mxu0 0.0
    %454 = vmatprep.subr.mxu0 0.0
    %455 = vmatpush1.msra.mxu0 0.0
    %456 = vmatprep.subr.mxu0 0.0
    %457 = vmatpush1.msra.mxu0 0.0
    %458 = vmatprep.subr.mxu0 0.0
    %459 = vmatpush1.msra.mxu0 0.0
    %460 = vmatprep.subr.mxu0 0.0
    %461 = vmatpush1.msra.mxu0 0.0
    %462 = vmatprep.subr.mxu0 0.0
    %463 = vmatpush1.msra.mxu0 0.0
    %464 = vmatprep.subr.mxu0 0.0
    %465 = vmatpush1.msra.mxu0 0.0
    %466 = vmatprep.mubr.f32.mxu0 0.0
    %467 = vmatmul.mubr.f32.gmra.mrb[0].mxu0 %v400
    %v468 = vpop.f32.mrb[0].mxu0
    %v469 = vadd.f32 0.0, %v468
    %v470 = vpop.f32.mrb[0].mxu0
    %v471 = vadd.f32 0.0, %v470
    %472 = vdwg.mxu0
    %v475 = vcombine.low %v469, %v471
    %v477 = vunpack.c.l.s4 1983009808
    %v478 = vunpack.c.0.s8 %v477
    %v479 = vlaneseq
    %v480 = vshrl.u32 %v479, 7
    %v481 = vsub.s32 %v478, %v480
    %v482 = vrot.slane %v475, %v481
    %v484 = vadd.f32 %v398, %v482
    %v485 = vxor.u32 %v484, 2147483648
    %v486 = vmul.f32 %v485, 1.442695
    %v487 = vpow.pop %v486
    %v488 = vadd.f32 %v487, 1.0
    %v489 = vrcp.pop %v488
    %v490 = vmul.f32 1.0, %v489
    %492 = vrot.lane.b32.xlu0 %v484, 64
    %v493 = vpop.permute.xlu0 %492
    %v494 = vrot.slane %v493, 2
    %v496 = vtanh.pop %v494
    %v497 = vmul.f32 %v490, %v387
    %v498 = vmul.f32 %v490, %v496
    %500 = vrot.lane.b32.xlu0 %v498, 64
    %v501 = vpop.permute.xlu0 %500
    %v503 = vadd.f32 %v497, %v501
    %v504 = vtanh.pop %v503
    %v506 = vrot.slane %v490, 2
    %509 = vrot.lane.b32.xlu0 %v504, 64
    %v510 = vpop.permute.xlu0 %509
    %v512 = vmul.f32 %v506, %v510
    %s513 = scalar_lea.vmem %s0, 16
    %v514 = vld [vmem:[%s513] sm:$0xf]
    %v516 = vsel %vm50, %v512, 0
    %518 = vmatprep.subr.mxu0 %v34
    %519 = vmatpush1.msra.mxu0 %v33
    %520 = vmatprep.subr.mxu0 %v36
    %521 = vmatpush1.msra.mxu0 %v35
    %522 = vmatprep.subr.mxu0 %v38
    %523 = vmatpush1.msra.mxu0 %v37
    %524 = vmatprep.subr.mxu0 %v40
    %525 = vmatpush1.msra.mxu0 %v39
    %526 = vmatprep.subr.mxu0 %v42
    %527 = vmatpush1.msra.mxu0 %v41
    %528 = vmatprep.subr.mxu0 %v44
    %529 = vmatpush1.msra.mxu0 %v43
    %530 = vmatprep.subr.mxu0 %v46
    %531 = vmatpush1.msra.mxu0 %v45
    %532 = vmatprep.subr.mxu0 %v48
    %533 = vmatpush1.msra.mxu0 %v47
    %534 = vmatprep.subr.mxu0 0.0
    %535 = vmatpush1.msra.mxu0 0.0
    %536 = vmatprep.subr.mxu0 0.0
    %537 = vmatpush1.msra.mxu0 0.0
    %538 = vmatprep.subr.mxu0 0.0
    %539 = vmatpush1.msra.mxu0 0.0
    %540 = vmatprep.subr.mxu0 0.0
    %541 = vmatpush1.msra.mxu0 0.0
    %542 = vmatprep.subr.mxu0 0.0
    %543 = vmatpush1.msra.mxu0 0.0
    %544 = vmatprep.subr.mxu0 0.0
    %545 = vmatpush1.msra.mxu0 0.0
    %546 = vmatprep.subr.mxu0 0.0
    %547 = vmatpush1.msra.mxu0 0.0
    %548 = vmatprep.subr.mxu0 0.0
    %549 = vmatpush1.msra.mxu0 0.0
    %550 = vmatprep.subr.mxu0 0.0
    %551 = vmatpush1.msra.mxu0 0.0
    %552 = vmatprep.subr.mxu0 0.0
    %553 = vmatpush1.msra.mxu0 0.0
    %554 = vmatprep.subr.mxu0 0.0
    %555 = vmatpush1.msra.mxu0 0.0
    %556 = vmatprep.subr.mxu0 0.0
    %557 = vmatpush1.msra.mxu0 0.0
    %558 = vmatprep.subr.mxu0 0.0
    %559 = vmatpush1.msra.mxu0 0.0
    %560 = vmatprep.subr.mxu0 0.0
    %561 = vmatpush1.msra.mxu0 0.0
    %562 = vmatprep.subr.mxu0 0.0
    %563 = vmatpush1.msra.mxu0 0.0
    %564 = vmatprep.subr.mxu0 0.0
    %565 = vmatpush1.msra.mxu0 0.0
    %566 = vmatprep.subr.mxu0 0.0
    %567 = vmatpush1.msra.mxu0 0.0
    %568 = vmatprep.subr.mxu0 0.0
    %569 = vmatpush1.msra.mxu0 0.0
    %570 = vmatprep.subr.mxu0 0.0
    %571 = vmatpush1.msra.mxu0 0.0
    %572 = vmatprep.subr.mxu0 0.0
    %573 = vmatpush1.msra.mxu0 0.0
    %574 = vmatprep.subr.mxu0 0.0
    %575 = vmatpush1.msra.mxu0 0.0
    %576 = vmatprep.subr.mxu0 0.0
    %577 = vmatpush1.msra.mxu0 0.0
    %578 = vmatprep.subr.mxu0 0.0
    %579 = vmatpush1.msra.mxu0 0.0
    %580 = vmatprep.subr.mxu0 0.0
    %581 = vmatpush1.msra.mxu0 0.0
    %582 = vmatprep.mubr.f32.mxu0 0.0
    %583 = vmatmul.mubr.f32.gmra.mrb[0].mxu0 %v516
    %v584 = vpop.f32.mrb[0].mxu0
    %v585 = vadd.f32 0.0, %v584
    %v586 = vpop.f32.mrb[0].mxu0
    %v587 = vadd.f32 0.0, %v586
    %588 = vdwg.mxu0
    %v591 = vcombine.low %v585, %v587
    %v593 = vunpack.c.l.s4 1983009808
    %v594 = vunpack.c.0.s8 %v593
    %v595 = vlaneseq
    %v596 = vshrl.u32 %v595, 7
    %v597 = vsub.s32 %v594, %v596
    %v598 = vrot.slane %v591, %v597
    %v600 = vadd.f32 %v514, %v598
    %v601 = vxor.u32 %v600, 2147483648
    %v602 = vmul.f32 %v601, 1.442695
    %v603 = vpow.pop %v602
    %v604 = vadd.f32 %v603, 1.0
    %v605 = vrcp.pop %v604
    %v606 = vmul.f32 1.0, %v605
    %608 = vrot.lane.b32.xlu0 %v600, 64
    %v609 = vpop.permute.xlu0 %608
    %v610 = vrot.slane %v609, 2
    %v612 = vtanh.pop %v610
    %v613 = vmul.f32 %v606, %v503
    %v614 = vmul.f32 %v606, %v612
    %616 = vrot.lane.b32.xlu0 %v614, 64
    %v617 = vpop.permute.xlu0 %616
    %v619 = vadd.f32 %v613, %v617
    %v620 = vtanh.pop %v619
    %v622 = vrot.slane %v606, 2
    %625 = vrot.lane.b32.xlu0 %v620, 64
    %v626 = vpop.permute.xlu0 %625
    %v628 = vmul.f32 %v622, %v626
    %s629 = scalar_lea.vmem %s0, 20
    %v630 = vld [vmem:[%s629] sm:$0xf]
    %v632 = vsel %vm50, %v628, 0
    %634 = vmatprep.subr.mxu0 %v34
    %635 = vmatpush1.msra.mxu0 %v33
    %636 = vmatprep.subr.mxu0 %v36
    %637 = vmatpush1.msra.mxu0 %v35
    %638 = vmatprep.subr.mxu0 %v38
    %639 = vmatpush1.msra.mxu0 %v37
    %640 = vmatprep.subr.mxu0 %v40
    %641 = vmatpush1.msra.mxu0 %v39
    %642 = vmatprep.subr.mxu0 %v42
    %643 = vmatpush1.msra.mxu0 %v41
    %644 = vmatprep.subr.mxu0 %v44
    %645 = vmatpush1.msra.mxu0 %v43
    %646 = vmatprep.subr.mxu0 %v46
    %647 = vmatpush1.msra.mxu0 %v45
    %648 = vmatprep.subr.mxu0 %v48
    %649 = vmatpush1.msra.mxu0 %v47
    %650 = vmatprep.subr.mxu0 0.0
    %651 = vmatpush1.msra.mxu0 0.0
    %652 = vmatprep.subr.mxu0 0.0
    %653 = vmatpush1.msra.mxu0 0.0
    %654 = vmatprep.subr.mxu0 0.0
    %655 = vmatpush1.msra.mxu0 0.0
    %656 = vmatprep.subr.mxu0 0.0
    %657 = vmatpush1.msra.mxu0 0.0
    %658 = vmatprep.subr.mxu0 0.0
    %659 = vmatpush1.msra.mxu0 0.0
    %660 = vmatprep.subr.mxu0 0.0
    %661 = vmatpush1.msra.mxu0 0.0
    %662 = vmatprep.subr.mxu0 0.0
    %663 = vmatpush1.msra.mxu0 0.0
    %664 = vmatprep.subr.mxu0 0.0
    %665 = vmatpush1.msra.mxu0 0.0
    %666 = vmatprep.subr.mxu0 0.0
    %667 = vmatpush1.msra.mxu0 0.0
    %668 = vmatprep.subr.mxu0 0.0
    %669 = vmatpush1.msra.mxu0 0.0
    %670 = vmatprep.subr.mxu0 0.0
    %671 = vmatpush1.msra.mxu0 0.0
    %672 = vmatprep.subr.mxu0 0.0
    %673 = vmatpush1.msra.mxu0 0.0
    %674 = vmatprep.subr.mxu0 0.0
    %675 = vmatpush1.msra.mxu0 0.0
    %676 = vmatprep.subr.mxu0 0.0
    %677 = vmatpush1.msra.mxu0 0.0
    %678 = vmatprep.subr.mxu0 0.0
    %679 = vmatpush1.msra.mxu0 0.0
    %680 = vmatprep.subr.mxu0 0.0
    %681 = vmatpush1.msra.mxu0 0.0
    %682 = vmatprep.subr.mxu0 0.0
    %683 = vmatpush1.msra.mxu0 0.0
    %684 = vmatprep.subr.mxu0 0.0
    %685 = vmatpush1.msra.mxu0 0.0
    %686 = vmatprep.subr.mxu0 0.0
    %687 = vmatpush1.msra.mxu0 0.0
    %688 = vmatprep.subr.mxu0 0.0
    %689 = vmatpush1.msra.mxu0 0.0
    %690 = vmatprep.subr.mxu0 0.0
    %691 = vmatpush1.msra.mxu0 0.0
    %692 = vmatprep.subr.mxu0 0.0
    %693 = vmatpush1.msra.mxu0 0.0
    %694 = vmatprep.subr.mxu0 0.0
    %695 = vmatpush1.msra.mxu0 0.0
    %696 = vmatprep.subr.mxu0 0.0
    %697 = vmatpush1.msra.mxu0 0.0
    %698 = vmatprep.mubr.f32.mxu0 0.0
    %699 = vmatmul.mubr.f32.gmra.mrb[0].mxu0 %v632
    %v700 = vpop.f32.mrb[0].mxu0
    %v701 = vadd.f32 0.0, %v700
    %v702 = vpop.f32.mrb[0].mxu0
    %v703 = vadd.f32 0.0, %v702
    %704 = vdwg.mxu0
    %v707 = vcombine.low %v701, %v703
    %v709 = vunpack.c.l.s4 1983009808
    %v710 = vunpack.c.0.s8 %v709
    %v711 = vlaneseq
    %v712 = vshrl.u32 %v711, 7
    %v713 = vsub.s32 %v710, %v712
    %v714 = vrot.slane %v707, %v713
    %v716 = vadd.f32 %v630, %v714
    %v717 = vxor.u32 %v716, 2147483648
    %v718 = vmul.f32 %v717, 1.442695
    %v719 = vpow.pop %v718
    %v720 = vadd.f32 %v719, 1.0
    %v721 = vrcp.pop %v720
    %v722 = vmul.f32 1.0, %v721
    %724 = vrot.lane.b32.xlu0 %v716, 64
    %v725 = vpop.permute.xlu0 %724
    %v726 = vrot.slane %v725, 2
    %v728 = vtanh.pop %v726
    %v729 = vmul.f32 %v722, %v619
    %v730 = vmul.f32 %v722, %v728
    %732 = vrot.lane.b32.xlu0 %v730, 64
    %v733 = vpop.permute.xlu0 %732
    %v735 = vadd.f32 %v729, %v733
    %v736 = vtanh.pop %v735
    %v738 = vrot.slane %v722, 2
    %741 = vrot.lane.b32.xlu0 %v736, 64
    %v742 = vpop.permute.xlu0 %741
    %v744 = vmul.f32 %v738, %v742
    %s745 = scalar_lea.vmem %s0, 24
    %v746 = vld [vmem:[%s745] sm:$0xf]
    %v748 = vsel %vm50, %v744, 0
    %750 = vmatprep.subr.mxu0 %v34
    %751 = vmatpush1.msra.mxu0 %v33
    %752 = vmatprep.subr.mxu0 %v36
    %753 = vmatpush1.msra.mxu0 %v35
    %754 = vmatprep.subr.mxu0 %v38
    %755 = vmatpush1.msra.mxu0 %v37
    %756 = vmatprep.subr.mxu0 %v40
    %757 = vmatpush1.msra.mxu0 %v39
    %758 = vmatprep.subr.mxu0 %v42
    %759 = vmatpush1.msra.mxu0 %v41
    %760 = vmatprep.subr.mxu0 %v44
    %761 = vmatpush1.msra.mxu0 %v43
    %762 = vmatprep.subr.mxu0 %v46
    %763 = vmatpush1.msra.mxu0 %v45
    %764 = vmatprep.subr.mxu0 %v48
    %765 = vmatpush1.msra.mxu0 %v47
    %766 = vmatprep.subr.mxu0 0.0
    %767 = vmatpush1.msra.mxu0 0.0
    %768 = vmatprep.subr.mxu0 0.0
    %769 = vmatpush1.msra.mxu0 0.0
    %770 = vmatprep.subr.mxu0 0.0
    %771 = vmatpush1.msra.mxu0 0.0
    %772 = vmatprep.subr.mxu0 0.0
    %773 = vmatpush1.msra.mxu0 0.0
    %774 = vmatprep.subr.mxu0 0.0
    %775 = vmatpush1.msra.mxu0 0.0
    %776 = vmatprep.subr.mxu0 0.0
    %777 = vmatpush1.msra.mxu0 0.0
    %778 = vmatprep.subr.mxu0 0.0
    %779 = vmatpush1.msra.mxu0 0.0
    %780 = vmatprep.subr.mxu0 0.0
    %781 = vmatpush1.msra.mxu0 0.0
    %782 = vmatprep.subr.mxu0 0.0
    %783 = vmatpush1.msra.mxu0 0.0
    %784 = vmatprep.subr.mxu0 0.0
    %785 = vmatpush1.msra.mxu0 0.0
    %786 = vmatprep.subr.mxu0 0.0
    %787 = vmatpush1.msra.mxu0 0.0
    %788 = vmatprep.subr.mxu0 0.0
    %789 = vmatpush1.msra.mxu0 0.0
    %790 = vmatprep.subr.mxu0 0.0
    %791 = vmatpush1.msra.mxu0 0.0
    %792 = vmatprep.subr.mxu0 0.0
    %793 = vmatpush1.msra.mxu0 0.0
    %794 = vmatprep.subr.mxu0 0.0
    %795 = vmatpush1.msra.mxu0 0.0
    %796 = vmatprep.subr.mxu0 0.0
    %797 = vmatpush1.msra.mxu0 0.0
    %798 = vmatprep.subr.mxu0 0.0
    %799 = vmatpush1.msra.mxu0 0.0
    %800 = vmatprep.subr.mxu0 0.0
    %801 = vmatpush1.msra.mxu0 0.0
    %802 = vmatprep.subr.mxu0 0.0
    %803 = vmatpush1.msra.mxu0 0.0
    %804 = vmatprep.subr.mxu0 0.0
    %805 = vmatpush1.msra.mxu0 0.0
    %806 = vmatprep.subr.mxu0 0.0
    %807 = vmatpush1.msra.mxu0 0.0
    %808 = vmatprep.subr.mxu0 0.0
    %809 = vmatpush1.msra.mxu0 0.0
    %810 = vmatprep.subr.mxu0 0.0
    %811 = vmatpush1.msra.mxu0 0.0
    %812 = vmatprep.subr.mxu0 0.0
    %813 = vmatpush1.msra.mxu0 0.0
    %814 = vmatprep.mubr.f32.mxu0 0.0
    %815 = vmatmul.mubr.f32.gmra.mrb[0].mxu0 %v748
    %v816 = vpop.f32.mrb[0].mxu0
    %v817 = vadd.f32 0.0, %v816
    %v818 = vpop.f32.mrb[0].mxu0
    %v819 = vadd.f32 0.0, %v818
    %820 = vdwg.mxu0
    %v823 = vcombine.low %v817, %v819
    %v825 = vunpack.c.l.s4 1983009808
    %v826 = vunpack.c.0.s8 %v825
    %v827 = vlaneseq
    %v828 = vshrl.u32 %v827, 7
    %v829 = vsub.s32 %v826, %v828
    %v830 = vrot.slane %v823, %v829
    %v832 = vadd.f32 %v746, %v830
    %v833 = vxor.u32 %v832, 2147483648
    %v834 = vmul.f32 %v833, 1.442695
    %v835 = vpow.pop %v834
    %v836 = vadd.f32 %v835, 1.0
    %v837 = vrcp.pop %v836
    %v838 = vmul.f32 1.0, %v837
    %840 = vrot.lane.b32.xlu0 %v832, 64
    %v841 = vpop.permute.xlu0 %840
    %v842 = vrot.slane %v841, 2
    %v844 = vtanh.pop %v842
    %v845 = vmul.f32 %v838, %v735
    %v846 = vmul.f32 %v838, %v844
    %848 = vrot.lane.b32.xlu0 %v846, 64
    %v849 = vpop.permute.xlu0 %848
    %v851 = vadd.f32 %v845, %v849
    %v852 = vtanh.pop %v851
    %v854 = vrot.slane %v838, 2
    %857 = vrot.lane.b32.xlu0 %v852, 64
    %v858 = vpop.permute.xlu0 %857
    %v860 = vmul.f32 %v854, %v858
    %s861 = scalar_lea.vmem %s0, 28
    %v862 = vld [vmem:[%s861] sm:$0xf]
    %v864 = vsel %vm50, %v860, 0
    %866 = vmatprep.subr.mxu0 %v34
    %867 = vmatpush1.msra.mxu0 %v33
    %868 = vmatprep.subr.mxu0 %v36
    %869 = vmatpush1.msra.mxu0 %v35
    %870 = vmatprep.subr.mxu0 %v38
    %871 = vmatpush1.msra.mxu0 %v37
    %872 = vmatprep.subr.mxu0 %v40
    %873 = vmatpush1.msra.mxu0 %v39
    %874 = vmatprep.subr.mxu0 %v42
    %875 = vmatpush1.msra.mxu0 %v41
    %876 = vmatprep.subr.mxu0 %v44
    %877 = vmatpush1.msra.mxu0 %v43
    %878 = vmatprep.subr.mxu0 %v46
    %879 = vmatpush1.msra.mxu0 %v45
    %880 = vmatprep.subr.mxu0 %v48
    %881 = vmatpush1.msra.mxu0 %v47
    %882 = vmatprep.subr.mxu0 0.0
    %883 = vmatpush1.msra.mxu0 0.0
    %884 = vmatprep.subr.mxu0 0.0
    %885 = vmatpush1.msra.mxu0 0.0
    %886 = vmatprep.subr.mxu0 0.0
    %887 = vmatpush1.msra.mxu0 0.0
    %888 = vmatprep.subr.mxu0 0.0
    %889 = vmatpush1.msra.mxu0 0.0
    %890 = vmatprep.subr.mxu0 0.0
    %891 = vmatpush1.msra.mxu0 0.0
    %892 = vmatprep.subr.mxu0 0.0
    %893 = vmatpush1.msra.mxu0 0.0
    %894 = vmatprep.subr.mxu0 0.0
    %895 = vmatpush1.msra.mxu0 0.0
    %896 = vmatprep.subr.mxu0 0.0
    %897 = vmatpush1.msra.mxu0 0.0
    %898 = vmatprep.subr.mxu0 0.0
    %899 = vmatpush1.msra.mxu0 0.0
    %900 = vmatprep.subr.mxu0 0.0
    %901 = vmatpush1.msra.mxu0 0.0
    %902 = vmatprep.subr.mxu0 0.0
    %903 = vmatpush1.msra.mxu0 0.0
    %904 = vmatprep.subr.mxu0 0.0
    %905 = vmatpush1.msra.mxu0 0.0
    %906 = vmatprep.subr.mxu0 0.0
    %907 = vmatpush1.msra.mxu0 0.0
    %908 = vmatprep.subr.mxu0 0.0
    %909 = vmatpush1.msra.mxu0 0.0
    %910 = vmatprep.subr.mxu0 0.0
    %911 = vmatpush1.msra.mxu0 0.0
    %912 = vmatprep.subr.mxu0 0.0
    %913 = vmatpush1.msra.mxu0 0.0
    %914 = vmatprep.subr.mxu0 0.0
    %915 = vmatpush1.msra.mxu0 0.0
    %916 = vmatprep.subr.mxu0 0.0
    %917 = vmatpush1.msra.mxu0 0.0
    %918 = vmatprep.subr.mxu0 0.0
    %919 = vmatpush1.msra.mxu0 0.0
    %920 = vmatprep.subr.mxu0 0.0
    %921 = vmatpush1.msra.mxu0 0.0
    %922 = vmatprep.subr.mxu0 0.0
    %923 = vmatpush1.msra.mxu0 0.0
    %924 = vmatprep.subr.mxu0 0.0
    %925 = vmatpush1.msra.mxu0 0.0
    %926 = vmatprep.subr.mxu0 0.0
    %927 = vmatpush1.msra.mxu0 0.0
    %928 = vmatprep.subr.mxu0 0.0
    %929 = vmatpush1.msra.mxu0 0.0
    %930 = vmatprep.mubr.f32.mxu0 0.0
    %931 = vmatmul.mubr.f32.gmra.mrb[0].mxu0 %v864
    %v932 = vpop.f32.mrb[0].mxu0
    %v933 = vadd.f32 0.0, %v932
    %v934 = vpop.f32.mrb[0].mxu0
    %v935 = vadd.f32 0.0, %v934
    %936 = vdwg.mxu0
    %v939 = vcombine.low %v933, %v935
    %v941 = vunpack.c.l.s4 1983009808
    %v942 = vunpack.c.0.s8 %v941
    %v943 = vlaneseq
    %v944 = vshrl.u32 %v943, 7
    %v945 = vsub.s32 %v942, %v944
    %v946 = vrot.slane %v939, %v945
    %v948 = vadd.f32 %v862, %v946
    %v949 = vxor.u32 %v948, 2147483648
    %v950 = vmul.f32 %v949, 1.442695
    %v951 = vpow.pop %v950
    %v952 = vadd.f32 %v951, 1.0
    %v953 = vrcp.pop %v952
    %v954 = vmul.f32 1.0, %v953
    %956 = vrot.lane.b32.xlu0 %v948, 64
    %v957 = vpop.permute.xlu0 %956
    %v958 = vrot.slane %v957, 2
    %v960 = vtanh.pop %v958
    %v961 = vmul.f32 %v954, %v851
    %v962 = vmul.f32 %v954, %v960
    %964 = vrot.lane.b32.xlu0 %v962, 64
    %v965 = vpop.permute.xlu0 %964
    %v967 = vadd.f32 %v961, %v965
    %v968 = vtanh.pop %v967
    %v970 = vrot.slane %v954, 2
    %973 = vrot.lane.b32.xlu0 %v968, 64
    %v974 = vpop.permute.xlu0 %973
    %v976 = vmul.f32 %v970, %v974
    %s977 = scalar_lea.vmem %s0, 32
    %v978 = vld [vmem:[%s977] sm:$0xf]
    %v980 = vsel %vm50, %v976, 0
    %982 = vmatprep.subr.mxu0 %v34
    %983 = vmatpush1.msra.mxu0 %v33
    %984 = vmatprep.subr.mxu0 %v36
    %985 = vmatpush1.msra.mxu0 %v35
    %986 = vmatprep.subr.mxu0 %v38
    %987 = vmatpush1.msra.mxu0 %v37
    %988 = vmatprep.subr.mxu0 %v40
    %989 = vmatpush1.msra.mxu0 %v39
    %990 = vmatprep.subr.mxu0 %v42
    %991 = vmatpush1.msra.mxu0 %v41
    %992 = vmatprep.subr.mxu0 %v44
    %993 = vmatpush1.msra.mxu0 %v43
    %994 = vmatprep.subr.mxu0 %v46
    %995 = vmatpush1.msra.mxu0 %v45
    %996 = vmatprep.subr.mxu0 %v48
    %997 = vmatpush1.msra.mxu0 %v47
    %998 = vmatprep.subr.mxu0 0.0
    %999 = vmatpush1.msra.mxu0 0.0
    %1000 = vmatprep.subr.mxu0 0.0
    %1001 = vmatpush1.msra.mxu0 0.0
    %1002 = vmatprep.subr.mxu0 0.0
    %1003 = vmatpush1.msra.mxu0 0.0
    %1004 = vmatprep.subr.mxu0 0.0
    %1005 = vmatpush1.msra.mxu0 0.0
    %1006 = vmatprep.subr.mxu0 0.0
    %1007 = vmatpush1.msra.mxu0 0.0
    %1008 = vmatprep.subr.mxu0 0.0
    %1009 = vmatpush1.msra.mxu0 0.0
    %1010 = vmatprep.subr.mxu0 0.0
    %1011 = vmatpush1.msra.mxu0 0.0
    %1012 = vmatprep.subr.mxu0 0.0
    %1013 = vmatpush1.msra.mxu0 0.0
    %1014 = vmatprep.subr.mxu0 0.0
    %1015 = vmatpush1.msra.mxu0 0.0
    %1016 = vmatprep.subr.mxu0 0.0
    %1017 = vmatpush1.msra.mxu0 0.0
    %1018 = vmatprep.subr.mxu0 0.0
    %1019 = vmatpush1.msra.mxu0 0.0
    %1020 = vmatprep.subr.mxu0 0.0
    %1021 = vmatpush1.msra.mxu0 0.0
    %1022 = vmatprep.subr.mxu0 0.0
    %1023 = vmatpush1.msra.mxu0 0.0
    %1024 = vmatprep.subr.mxu0 0.0
    %1025 = vmatpush1.msra.mxu0 0.0
    %1026 = vmatprep.subr.mxu0 0.0
    %1027 = vmatpush1.msra.mxu0 0.0
    %1028 = vmatprep.subr.mxu0 0.0
    %1029 = vmatpush1.msra.mxu0 0.0
    %1030 = vmatprep.subr.mxu0 0.0
    %1031 = vmatpush1.msra.mxu0 0.0
    %1032 = vmatprep.subr.mxu0 0.0
    %1033 = vmatpush1.msra.mxu0 0.0
    %1034 = vmatprep.subr.mxu0 0.0
    %1035 = vmatpush1.msra.mxu0 0.0
    %1036 = vmatprep.subr.mxu0 0.0
    %1037 = vmatpush1.msra.mxu0 0.0
    %1038 = vmatprep.subr.mxu0 0.0
    %1039 = vmatpush1.msra.mxu0 0.0
    %1040 = vmatprep.subr.mxu0 0.0
    %1041 = vmatpush1.msra.mxu0 0.0
    %1042 = vmatprep.subr.mxu0 0.0
    %1043 = vmatpush1.msra.mxu0 0.0
    %1044 = vmatprep.subr.mxu0 0.0
    %1045 = vmatpush1.msra.mxu0 0.0
    %1046 = vmatprep.mubr.f32.mxu0 0.0
    %1047 = vmatmul.mubr.f32.gmra.mrb[0].mxu0 %v980
    %v1048 = vpop.f32.mrb[0].mxu0
    %v1049 = vadd.f32 0.0, %v1048
    %v1050 = vpop.f32.mrb[0].mxu0
    %v1051 = vadd.f32 0.0, %v1050
    %1052 = vdwg.mxu0
    %v1055 = vcombine.low %v1049, %v1051
    %v1057 = vunpack.c.l.s4 1983009808
    %v1058 = vunpack.c.0.s8 %v1057
    %v1059 = vlaneseq
    %v1060 = vshrl.u32 %v1059, 7
    %v1061 = vsub.s32 %v1058, %v1060
    %v1062 = vrot.slane %v1055, %v1061
    %v1064 = vadd.f32 %v978, %v1062
    %v1065 = vxor.u32 %v1064, 2147483648
    %v1066 = vmul.f32 %v1065, 1.442695
    %v1067 = vpow.pop %v1066
    %v1068 = vadd.f32 %v1067, 1.0
    %v1069 = vrcp.pop %v1068
    %v1070 = vmul.f32 1.0, %v1069
    %1072 = vrot.lane.b32.xlu0 %v1064, 64
    %v1073 = vpop.permute.xlu0 %1072
    %v1074 = vrot.slane %v1073, 2
    %v1076 = vtanh.pop %v1074
    %v1077 = vmul.f32 %v1070, %v967
    %v1078 = vmul.f32 %v1070, %v1076
    %1080 = vrot.lane.b32.xlu0 %v1078, 64
    %v1081 = vpop.permute.xlu0 %1080
    %v1083 = vadd.f32 %v1077, %v1081
    %v1084 = vtanh.pop %v1083
    %v1086 = vrot.slane %v1070, 2
    %1089 = vrot.lane.b32.xlu0 %v1084, 64
    %v1090 = vpop.permute.xlu0 %1089
    %v1092 = vmul.f32 %v1086, %v1090
    %s1093 = scalar_lea.vmem %s0, 36
    %v1094 = vld [vmem:[%s1093] sm:$0xf]
    %v1096 = vsel %vm50, %v1092, 0
    %1098 = vmatprep.subr.mxu0 %v34
    %1099 = vmatpush1.msra.mxu0 %v33
    %1100 = vmatprep.subr.mxu0 %v36
    %1101 = vmatpush1.msra.mxu0 %v35
    %1102 = vmatprep.subr.mxu0 %v38
    %1103 = vmatpush1.msra.mxu0 %v37
    %1104 = vmatprep.subr.mxu0 %v40
    %1105 = vmatpush1.msra.mxu0 %v39
    %1106 = vmatprep.subr.mxu0 %v42
    %1107 = vmatpush1.msra.mxu0 %v41
    %1108 = vmatprep.subr.mxu0 %v44
    %1109 = vmatpush1.msra.mxu0 %v43
    %1110 = vmatprep.subr.mxu0 %v46
    %1111 = vmatpush1.msra.mxu0 %v45
    %1112 = vmatprep.subr.mxu0 %v48
    %1113 = vmatpush1.msra.mxu0 %v47
    %1114 = vmatprep.subr.mxu0 0.0
    %1115 = vmatpush1.msra.mxu0 0.0
    %1116 = vmatprep.subr.mxu0 0.0
    %1117 = vmatpush1.msra.mxu0 0.0
    %1118 = vmatprep.subr.mxu0 0.0
    %1119 = vmatpush1.msra.mxu0 0.0
    %1120 = vmatprep.subr.mxu0 0.0
    %1121 = vmatpush1.msra.mxu0 0.0
    %1122 = vmatprep.subr.mxu0 0.0
    %1123 = vmatpush1.msra.mxu0 0.0
    %1124 = vmatprep.subr.mxu0 0.0
    %1125 = vmatpush1.msra.mxu0 0.0
    %1126 = vmatprep.subr.mxu0 0.0
    %1127 = vmatpush1.msra.mxu0 0.0
    %1128 = vmatprep.subr.mxu0 0.0
    %1129 = vmatpush1.msra.mxu0 0.0
    %1130 = vmatprep.subr.mxu0 0.0
    %1131 = vmatpush1.msra.mxu0 0.0
    %1132 = vmatprep.subr.mxu0 0.0
    %1133 = vmatpush1.msra.mxu0 0.0
    %1134 = vmatprep.subr.mxu0 0.0
    %1135 = vmatpush1.msra.mxu0 0.0
    %1136 = vmatprep.subr.mxu0 0.0
    %1137 = vmatpush1.msra.mxu0 0.0
    %1138 = vmatprep.subr.mxu0 0.0
    %1139 = vmatpush1.msra.mxu0 0.0
    %1140 = vmatprep.subr.mxu0 0.0
    %1141 = vmatpush1.msra.mxu0 0.0
    %1142 = vmatprep.subr.mxu0 0.0
    %1143 = vmatpush1.msra.mxu0 0.0
    %1144 = vmatprep.subr.mxu0 0.0
    %1145 = vmatpush1.msra.mxu0 0.0
    %1146 = vmatprep.subr.mxu0 0.0
    %1147 = vmatpush1.msra.mxu0 0.0
    %1148 = vmatprep.subr.mxu0 0.0
    %1149 = vmatpush1.msra.mxu0 0.0
    %1150 = vmatprep.subr.mxu0 0.0
    %1151 = vmatpush1.msra.mxu0 0.0
    %1152 = vmatprep.subr.mxu0 0.0
    %1153 = vmatpush1.msra.mxu0 0.0
    %1154 = vmatprep.subr.mxu0 0.0
    %1155 = vmatpush1.msra.mxu0 0.0
    %1156 = vmatprep.subr.mxu0 0.0
    %1157 = vmatpush1.msra.mxu0 0.0
    %1158 = vmatprep.subr.mxu0 0.0
    %1159 = vmatpush1.msra.mxu0 0.0
    %1160 = vmatprep.subr.mxu0 0.0
    %1161 = vmatpush1.msra.mxu0 0.0
    %1162 = vmatprep.mubr.f32.mxu0 0.0
    %1163 = vmatmul.mubr.f32.gmra.mrb[0].mxu0 %v1096
    %v1164 = vpop.f32.mrb[0].mxu0
    %v1165 = vadd.f32 0.0, %v1164
    %v1166 = vpop.f32.mrb[0].mxu0
    %v1167 = vadd.f32 0.0, %v1166
    %1168 = vdwg.mxu0
    %v1171 = vcombine.low %v1165, %v1167
    %v1173 = vunpack.c.l.s4 1983009808
    %v1174 = vunpack.c.0.s8 %v1173
    %v1175 = vlaneseq
    %v1176 = vshrl.u32 %v1175, 7
    %v1177 = vsub.s32 %v1174, %v1176
    %v1178 = vrot.slane %v1171, %v1177
    %v1180 = vadd.f32 %v1094, %v1178
    %v1181 = vxor.u32 %v1180, 2147483648
    %v1182 = vmul.f32 %v1181, 1.442695
    %v1183 = vpow.pop %v1182
    %v1184 = vadd.f32 %v1183, 1.0
    %v1185 = vrcp.pop %v1184
    %v1186 = vmul.f32 1.0, %v1185
    %1188 = vrot.lane.b32.xlu0 %v1180, 64
    %v1189 = vpop.permute.xlu0 %1188
    %v1190 = vrot.slane %v1189, 2
    %v1192 = vtanh.pop %v1190
    %v1193 = vmul.f32 %v1186, %v1083
    %v1194 = vmul.f32 %v1186, %v1192
    %1196 = vrot.lane.b32.xlu0 %v1194, 64
    %v1197 = vpop.permute.xlu0 %1196
    %v1199 = vadd.f32 %v1193, %v1197
    %v1200 = vtanh.pop %v1199
    %v1202 = vrot.slane %v1186, 2
    %1205 = vrot.lane.b32.xlu0 %v1200, 64
    %v1206 = vpop.permute.xlu0 %1205
    %v1208 = vmul.f32 %v1202, %v1206
    %s1209 = scalar_lea.vmem %s0, 40
    %v1210 = vld [vmem:[%s1209] sm:$0xf]
    %v1212 = vsel %vm50, %v1208, 0
    %1214 = vmatprep.subr.mxu0 %v34
    %1215 = vmatpush1.msra.mxu0 %v33
    %1216 = vmatprep.subr.mxu0 %v36
    %1217 = vmatpush1.msra.mxu0 %v35
    %1218 = vmatprep.subr.mxu0 %v38
    %1219 = vmatpush1.msra.mxu0 %v37
    %1220 = vmatprep.subr.mxu0 %v40
    %1221 = vmatpush1.msra.mxu0 %v39
    %1222 = vmatprep.subr.mxu0 %v42
    %1223 = vmatpush1.msra.mxu0 %v41
    %1224 = vmatprep.subr.mxu0 %v44
    %1225 = vmatpush1.msra.mxu0 %v43
    %1226 = vmatprep.subr.mxu0 %v46
    %1227 = vmatpush1.msra.mxu0 %v45
    %1228 = vmatprep.subr.mxu0 %v48
    %1229 = vmatpush1.msra.mxu0 %v47
    %1230 = vmatprep.subr.mxu0 0.0
    %1231 = vmatpush1.msra.mxu0 0.0
    %1232 = vmatprep.subr.mxu0 0.0
    %1233 = vmatpush1.msra.mxu0 0.0
    %1234 = vmatprep.subr.mxu0 0.0
    %1235 = vmatpush1.msra.mxu0 0.0
    %1236 = vmatprep.subr.mxu0 0.0
    %1237 = vmatpush1.msra.mxu0 0.0
    %1238 = vmatprep.subr.mxu0 0.0
    %1239 = vmatpush1.msra.mxu0 0.0
    %1240 = vmatprep.subr.mxu0 0.0
    %1241 = vmatpush1.msra.mxu0 0.0
    %1242 = vmatprep.subr.mxu0 0.0
    %1243 = vmatpush1.msra.mxu0 0.0
    %1244 = vmatprep.subr.mxu0 0.0
    %1245 = vmatpush1.msra.mxu0 0.0
    %1246 = vmatprep.subr.mxu0 0.0
    %1247 = vmatpush1.msra.mxu0 0.0
    %1248 = vmatprep.subr.mxu0 0.0
    %1249 = vmatpush1.msra.mxu0 0.0
    %1250 = vmatprep.subr.mxu0 0.0
    %1251 = vmatpush1.msra.mxu0 0.0
    %1252 = vmatprep.subr.mxu0 0.0
    %1253 = vmatpush1.msra.mxu0 0.0
    %1254 = vmatprep.subr.mxu0 0.0
    %1255 = vmatpush1.msra.mxu0 0.0
    %1256 = vmatprep.subr.mxu0 0.0
    %1257 = vmatpush1.msra.mxu0 0.0
    %1258 = vmatprep.subr.mxu0 0.0
    %1259 = vmatpush1.msra.mxu0 0.0
    %1260 = vmatprep.subr.mxu0 0.0
    %1261 = vmatpush1.msra.mxu0 0.0
    %1262 = vmatprep.subr.mxu0 0.0
    %1263 = vmatpush1.msra.mxu0 0.0
    %1264 = vmatprep.subr.mxu0 0.0
    %1265 = vmatpush1.msra.mxu0 0.0
    %1266 = vmatprep.subr.mxu0 0.0
    %1267 = vmatpush1.msra.mxu0 0.0
    %1268 = vmatprep.subr.mxu0 0.0
    %1269 = vmatpush1.msra.mxu0 0.0
    %1270 = vmatprep.subr.mxu0 0.0
    %1271 = vmatpush1.msra.mxu0 0.0
    %1272 = vmatprep.subr.mxu0 0.0
    %1273 = vmatpush1.msra.mxu0 0.0
    %1274 = vmatprep.subr.mxu0 0.0
    %1275 = vmatpush1.msra.mxu0 0.0
    %1276 = vmatprep.subr.mxu0 0.0
    %1277 = vmatpush1.msra.mxu0 0.0
    %1278 = vmatprep.mubr.f32.mxu0 0.0
    %1279 = vmatmul.mubr.f32.gmra.mrb[0].mxu0 %v1212
    %v1280 = vpop.f32.mrb[0].mxu0
    %v1281 = vadd.f32 0.0, %v1280
    %v1282 = vpop.f32.mrb[0].mxu0
    %v1283 = vadd.f32 0.0, %v1282
    %1284 = vdwg.mxu0
    %v1287 = vcombine.low %v1281, %v1283
    %v1289 = vunpack.c.l.s4 1983009808
    %v1290 = vunpack.c.0.s8 %v1289
    %v1291 = vlaneseq
    %v1292 = vshrl.u32 %v1291, 7
    %v1293 = vsub.s32 %v1290, %v1292
    %v1294 = vrot.slane %v1287, %v1293
    %v1296 = vadd.f32 %v1210, %v1294
    %v1297 = vxor.u32 %v1296, 2147483648
    %v1298 = vmul.f32 %v1297, 1.442695
    %v1299 = vpow.pop %v1298
    %v1300 = vadd.f32 %v1299, 1.0
    %v1301 = vrcp.pop %v1300
    %v1302 = vmul.f32 1.0, %v1301
    %1304 = vrot.lane.b32.xlu0 %v1296, 64
    %v1305 = vpop.permute.xlu0 %1304
    %v1306 = vrot.slane %v1305, 2
    %v1308 = vtanh.pop %v1306
    %v1309 = vmul.f32 %v1302, %v1199
    %v1310 = vmul.f32 %v1302, %v1308
    %1312 = vrot.lane.b32.xlu0 %v1310, 64
    %v1313 = vpop.permute.xlu0 %1312
    %v1315 = vadd.f32 %v1309, %v1313
    %v1316 = vtanh.pop %v1315
    %v1318 = vrot.slane %v1302, 2
    %1321 = vrot.lane.b32.xlu0 %v1316, 64
    %v1322 = vpop.permute.xlu0 %1321
    %v1324 = vmul.f32 %v1318, %v1322
    %s1325 = scalar_lea.vmem %s0, 44
    %v1326 = vld [vmem:[%s1325] sm:$0xf]
    %v1328 = vsel %vm50, %v1324, 0
    %1330 = vmatprep.subr.mxu0 %v34
    %1331 = vmatpush1.msra.mxu0 %v33
    %1332 = vmatprep.subr.mxu0 %v36
    %1333 = vmatpush1.msra.mxu0 %v35
    %1334 = vmatprep.subr.mxu0 %v38
    %1335 = vmatpush1.msra.mxu0 %v37
    %1336 = vmatprep.subr.mxu0 %v40
    %1337 = vmatpush1.msra.mxu0 %v39
    %1338 = vmatprep.subr.mxu0 %v42
    %1339 = vmatpush1.msra.mxu0 %v41
    %1340 = vmatprep.subr.mxu0 %v44
    %1341 = vmatpush1.msra.mxu0 %v43
    %1342 = vmatprep.subr.mxu0 %v46
    %1343 = vmatpush1.msra.mxu0 %v45
    %1344 = vmatprep.subr.mxu0 %v48
    %1345 = vmatpush1.msra.mxu0 %v47
    %1346 = vmatprep.subr.mxu0 0.0
    %1347 = vmatpush1.msra.mxu0 0.0
    %1348 = vmatprep.subr.mxu0 0.0
    %1349 = vmatpush1.msra.mxu0 0.0
    %1350 = vmatprep.subr.mxu0 0.0
    %1351 = vmatpush1.msra.mxu0 0.0
    %1352 = vmatprep.subr.mxu0 0.0
    %1353 = vmatpush1.msra.mxu0 0.0
    %1354 = vmatprep.subr.mxu0 0.0
    %1355 = vmatpush1.msra.mxu0 0.0
    %1356 = vmatprep.subr.mxu0 0.0
    %1357 = vmatpush1.msra.mxu0 0.0
    %1358 = vmatprep.subr.mxu0 0.0
    %1359 = vmatpush1.msra.mxu0 0.0
    %1360 = vmatprep.subr.mxu0 0.0
    %1361 = vmatpush1.msra.mxu0 0.0
    %1362 = vmatprep.subr.mxu0 0.0
    %1363 = vmatpush1.msra.mxu0 0.0
    %1364 = vmatprep.subr.mxu0 0.0
    %1365 = vmatpush1.msra.mxu0 0.0
    %1366 = vmatprep.subr.mxu0 0.0
    %1367 = vmatpush1.msra.mxu0 0.0
    %1368 = vmatprep.subr.mxu0 0.0
    %1369 = vmatpush1.msra.mxu0 0.0
    %1370 = vmatprep.subr.mxu0 0.0
    %1371 = vmatpush1.msra.mxu0 0.0
    %1372 = vmatprep.subr.mxu0 0.0
    %1373 = vmatpush1.msra.mxu0 0.0
    %1374 = vmatprep.subr.mxu0 0.0
    %1375 = vmatpush1.msra.mxu0 0.0
    %1376 = vmatprep.subr.mxu0 0.0
    %1377 = vmatpush1.msra.mxu0 0.0
    %1378 = vmatprep.subr.mxu0 0.0
    %1379 = vmatpush1.msra.mxu0 0.0
    %1380 = vmatprep.subr.mxu0 0.0
    %1381 = vmatpush1.msra.mxu0 0.0
    %1382 = vmatprep.subr.mxu0 0.0
    %1383 = vmatpush1.msra.mxu0 0.0
    %1384 = vmatprep.subr.mxu0 0.0
    %1385 = vmatpush1.msra.mxu0 0.0
    %1386 = vmatprep.subr.mxu0 0.0
    %1387 = vmatpush1.msra.mxu0 0.0
    %1388 = vmatprep.subr.mxu0 0.0
    %1389 = vmatpush1.msra.mxu0 0.0
    %1390 = vmatprep.subr.mxu0 0.0
    %1391 = vmatpush1.msra.mxu0 0.0
    %1392 = vmatprep.subr.mxu0 0.0
    %1393 = vmatpush1.msra.mxu0 0.0
    %1394 = vmatprep.mubr.f32.mxu0 0.0
    %1395 = vmatmul.mubr.f32.gmra.mrb[0].mxu0 %v1328
    %v1396 = vpop.f32.mrb[0].mxu0
    %v1397 = vadd.f32 0.0, %v1396
    %v1398 = vpop.f32.mrb[0].mxu0
    %v1399 = vadd.f32 0.0, %v1398
    %1400 = vdwg.mxu0
    %v1403 = vcombine.low %v1397, %v1399
    %v1405 = vunpack.c.l.s4 1983009808
    %v1406 = vunpack.c.0.s8 %v1405
    %v1407 = vlaneseq
    %v1408 = vshrl.u32 %v1407, 7
    %v1409 = vsub.s32 %v1406, %v1408
    %v1410 = vrot.slane %v1403, %v1409
    %v1412 = vadd.f32 %v1326, %v1410
    %v1413 = vxor.u32 %v1412, 2147483648
    %v1414 = vmul.f32 %v1413, 1.442695
    %v1415 = vpow.pop %v1414
    %v1416 = vadd.f32 %v1415, 1.0
    %v1417 = vrcp.pop %v1416
    %v1418 = vmul.f32 1.0, %v1417
    %1420 = vrot.lane.b32.xlu0 %v1412, 64
    %v1421 = vpop.permute.xlu0 %1420
    %v1422 = vrot.slane %v1421, 2
    %v1424 = vtanh.pop %v1422
    %v1425 = vmul.f32 %v1418, %v1315
    %v1426 = vmul.f32 %v1418, %v1424
    %1428 = vrot.lane.b32.xlu0 %v1426, 64
    %v1429 = vpop.permute.xlu0 %1428
    %v1431 = vadd.f32 %v1425, %v1429
    %v1432 = vtanh.pop %v1431
    %v1434 = vrot.slane %v1418, 2
    %1437 = vrot.lane.b32.xlu0 %v1432, 64
    %v1438 = vpop.permute.xlu0 %1437
    %v1440 = vmul.f32 %v1434, %v1438
    %s1441 = scalar_lea.vmem %s0, 48
    %v1442 = vld [vmem:[%s1441] sm:$0xf]
    %v1444 = vsel %vm50, %v1440, 0
    %1446 = vmatprep.subr.mxu0 %v34
    %1447 = vmatpush1.msra.mxu0 %v33
    %1448 = vmatprep.subr.mxu0 %v36
    %1449 = vmatpush1.msra.mxu0 %v35
    %1450 = vmatprep.subr.mxu0 %v38
    %1451 = vmatpush1.msra.mxu0 %v37
    %1452 = vmatprep.subr.mxu0 %v40
    %1453 = vmatpush1.msra.mxu0 %v39
    %1454 = vmatprep.subr.mxu0 %v42
    %1455 = vmatpush1.msra.mxu0 %v41
    %1456 = vmatprep.subr.mxu0 %v44
    %1457 = vmatpush1.msra.mxu0 %v43
    %1458 = vmatprep.subr.mxu0 %v46
    %1459 = vmatpush1.msra.mxu0 %v45
    %1460 = vmatprep.subr.mxu0 %v48
    %1461 = vmatpush1.msra.mxu0 %v47
    %1462 = vmatprep.subr.mxu0 0.0
    %1463 = vmatpush1.msra.mxu0 0.0
    %1464 = vmatprep.subr.mxu0 0.0
    %1465 = vmatpush1.msra.mxu0 0.0
    %1466 = vmatprep.subr.mxu0 0.0
    %1467 = vmatpush1.msra.mxu0 0.0
    %1468 = vmatprep.subr.mxu0 0.0
    %1469 = vmatpush1.msra.mxu0 0.0
    %1470 = vmatprep.subr.mxu0 0.0
    %1471 = vmatpush1.msra.mxu0 0.0
    %1472 = vmatprep.subr.mxu0 0.0
    %1473 = vmatpush1.msra.mxu0 0.0
    %1474 = vmatprep.subr.mxu0 0.0
    %1475 = vmatpush1.msra.mxu0 0.0
    %1476 = vmatprep.subr.mxu0 0.0
    %1477 = vmatpush1.msra.mxu0 0.0
    %1478 = vmatprep.subr.mxu0 0.0
    %1479 = vmatpush1.msra.mxu0 0.0
    %1480 = vmatprep.subr.mxu0 0.0
    %1481 = vmatpush1.msra.mxu0 0.0
    %1482 = vmatprep.subr.mxu0 0.0
    %1483 = vmatpush1.msra.mxu0 0.0
    %1484 = vmatprep.subr.mxu0 0.0
    %1485 = vmatpush1.msra.mxu0 0.0
    %1486 = vmatprep.subr.mxu0 0.0
    %1487 = vmatpush1.msra.mxu0 0.0
    %1488 = vmatprep.subr.mxu0 0.0
    %1489 = vmatpush1.msra.mxu0 0.0
    %1490 = vmatprep.subr.mxu0 0.0
    %1491 = vmatpush1.msra.mxu0 0.0
    %1492 = vmatprep.subr.mxu0 0.0
    %1493 = vmatpush1.msra.mxu0 0.0
    %1494 = vmatprep.subr.mxu0 0.0
    %1495 = vmatpush1.msra.mxu0 0.0
    %1496 = vmatprep.subr.mxu0 0.0
    %1497 = vmatpush1.msra.mxu0 0.0
    %1498 = vmatprep.subr.mxu0 0.0
    %1499 = vmatpush1.msra.mxu0 0.0
    %1500 = vmatprep.subr.mxu0 0.0
    %1501 = vmatpush1.msra.mxu0 0.0
    %1502 = vmatprep.subr.mxu0 0.0
    %1503 = vmatpush1.msra.mxu0 0.0
    %1504 = vmatprep.subr.mxu0 0.0
    %1505 = vmatpush1.msra.mxu0 0.0
    %1506 = vmatprep.subr.mxu0 0.0
    %1507 = vmatpush1.msra.mxu0 0.0
    %1508 = vmatprep.subr.mxu0 0.0
    %1509 = vmatpush1.msra.mxu0 0.0
    %1510 = vmatprep.mubr.f32.mxu0 0.0
    %1511 = vmatmul.mubr.f32.gmra.mrb[0].mxu0 %v1444
    %v1512 = vpop.f32.mrb[0].mxu0
    %v1513 = vadd.f32 0.0, %v1512
    %v1514 = vpop.f32.mrb[0].mxu0
    %v1515 = vadd.f32 0.0, %v1514
    %1516 = vdwg.mxu0
    %v1519 = vcombine.low %v1513, %v1515
    %v1521 = vunpack.c.l.s4 1983009808
    %v1522 = vunpack.c.0.s8 %v1521
    %v1523 = vlaneseq
    %v1524 = vshrl.u32 %v1523, 7
    %v1525 = vsub.s32 %v1522, %v1524
    %v1526 = vrot.slane %v1519, %v1525
    %v1528 = vadd.f32 %v1442, %v1526
    %v1529 = vxor.u32 %v1528, 2147483648
    %v1530 = vmul.f32 %v1529, 1.442695
    %v1531 = vpow.pop %v1530
    %v1532 = vadd.f32 %v1531, 1.0
    %v1533 = vrcp.pop %v1532
    %v1534 = vmul.f32 1.0, %v1533
    %1536 = vrot.lane.b32.xlu0 %v1528, 64
    %v1537 = vpop.permute.xlu0 %1536
    %v1538 = vrot.slane %v1537, 2
    %v1540 = vtanh.pop %v1538
    %v1541 = vmul.f32 %v1534, %v1431
    %v1542 = vmul.f32 %v1534, %v1540
    %1544 = vrot.lane.b32.xlu0 %v1542, 64
    %v1545 = vpop.permute.xlu0 %1544
    %v1547 = vadd.f32 %v1541, %v1545
    %v1548 = vtanh.pop %v1547
    %v1550 = vrot.slane %v1534, 2
    %1553 = vrot.lane.b32.xlu0 %v1548, 64
    %v1554 = vpop.permute.xlu0 %1553
    %v1556 = vmul.f32 %v1550, %v1554
    %s1557 = scalar_lea.vmem %s0, 52
    %v1558 = vld [vmem:[%s1557] sm:$0xf]
    %v1560 = vsel %vm50, %v1556, 0
    %1562 = vmatprep.subr.mxu0 %v34
    %1563 = vmatpush1.msra.mxu0 %v33
    %1564 = vmatprep.subr.mxu0 %v36
    %1565 = vmatpush1.msra.mxu0 %v35
    %1566 = vmatprep.subr.mxu0 %v38
    %1567 = vmatpush1.msra.mxu0 %v37
    %1568 = vmatprep.subr.mxu0 %v40
    %1569 = vmatpush1.msra.mxu0 %v39
    %1570 = vmatprep.subr.mxu0 %v42
    %1571 = vmatpush1.msra.mxu0 %v41
    %1572 = vmatprep.subr.mxu0 %v44
    %1573 = vmatpush1.msra.mxu0 %v43
    %1574 = vmatprep.subr.mxu0 %v46
    %1575 = vmatpush1.msra.mxu0 %v45
    %1576 = vmatprep.subr.mxu0 %v48
    %1577 = vmatpush1.msra.mxu0 %v47
    %1578 = vmatprep.subr.mxu0 0.0
    %1579 = vmatpush1.msra.mxu0 0.0
    %1580 = vmatprep.subr.mxu0 0.0
    %1581 = vmatpush1.msra.mxu0 0.0
    %1582 = vmatprep.subr.mxu0 0.0
    %1583 = vmatpush1.msra.mxu0 0.0
    %1584 = vmatprep.subr.mxu0 0.0
    %1585 = vmatpush1.msra.mxu0 0.0
    %1586 = vmatprep.subr.mxu0 0.0
    %1587 = vmatpush1.msra.mxu0 0.0
    %1588 = vmatprep.subr.mxu0 0.0
    %1589 = vmatpush1.msra.mxu0 0.0
    %1590 = vmatprep.subr.mxu0 0.0
    %1591 = vmatpush1.msra.mxu0 0.0
    %1592 = vmatprep.subr.mxu0 0.0
    %1593 = vmatpush1.msra.mxu0 0.0
    %1594 = vmatprep.subr.mxu0 0.0
    %1595 = vmatpush1.msra.mxu0 0.0
    %1596 = vmatprep.subr.mxu0 0.0
    %1597 = vmatpush1.msra.mxu0 0.0
    %1598 = vmatprep.subr.mxu0 0.0
    %1599 = vmatpush1.msra.mxu0 0.0
    %1600 = vmatprep.subr.mxu0 0.0
    %1601 = vmatpush1.msra.mxu0 0.0
    %1602 = vmatprep.subr.mxu0 0.0
    %1603 = vmatpush1.msra.mxu0 0.0
    %1604 = vmatprep.subr.mxu0 0.0
    %1605 = vmatpush1.msra.mxu0 0.0
    %1606 = vmatprep.subr.mxu0 0.0
    %1607 = vmatpush1.msra.mxu0 0.0
    %1608 = vmatprep.subr.mxu0 0.0
    %1609 = vmatpush1.msra.mxu0 0.0
    %1610 = vmatprep.subr.mxu0 0.0
    %1611 = vmatpush1.msra.mxu0 0.0
    %1612 = vmatprep.subr.mxu0 0.0
    %1613 = vmatpush1.msra.mxu0 0.0
    %1614 = vmatprep.subr.mxu0 0.0
    %1615 = vmatpush1.msra.mxu0 0.0
    %1616 = vmatprep.subr.mxu0 0.0
    %1617 = vmatpush1.msra.mxu0 0.0
    %1618 = vmatprep.subr.mxu0 0.0
    %1619 = vmatpush1.msra.mxu0 0.0
    %1620 = vmatprep.subr.mxu0 0.0
    %1621 = vmatpush1.msra.mxu0 0.0
    %1622 = vmatprep.subr.mxu0 0.0
    %1623 = vmatpush1.msra.mxu0 0.0
    %1624 = vmatprep.subr.mxu0 0.0
    %1625 = vmatpush1.msra.mxu0 0.0
    %1626 = vmatprep.mubr.f32.mxu0 0.0
    %1627 = vmatmul.mubr.f32.gmra.mrb[0].mxu0 %v1560
    %v1628 = vpop.f32.mrb[0].mxu0
    %v1629 = vadd.f32 0.0, %v1628
    %v1630 = vpop.f32.mrb[0].mxu0
    %v1631 = vadd.f32 0.0, %v1630
    %1632 = vdwg.mxu0
    %v1635 = vcombine.low %v1629, %v1631
    %v1637 = vunpack.c.l.s4 1983009808
    %v1638 = vunpack.c.0.s8 %v1637
    %v1639 = vlaneseq
    %v1640 = vshrl.u32 %v1639, 7
    %v1641 = vsub.s32 %v1638, %v1640
    %v1642 = vrot.slane %v1635, %v1641
    %v1644 = vadd.f32 %v1558, %v1642
    %v1645 = vxor.u32 %v1644, 2147483648
    %v1646 = vmul.f32 %v1645, 1.442695
    %v1647 = vpow.pop %v1646
    %v1648 = vadd.f32 %v1647, 1.0
    %v1649 = vrcp.pop %v1648
    %v1650 = vmul.f32 1.0, %v1649
    %1652 = vrot.lane.b32.xlu0 %v1644, 64
    %v1653 = vpop.permute.xlu0 %1652
    %v1654 = vrot.slane %v1653, 2
    %v1656 = vtanh.pop %v1654
    %v1657 = vmul.f32 %v1650, %v1547
    %v1658 = vmul.f32 %v1650, %v1656
    %1660 = vrot.lane.b32.xlu0 %v1658, 64
    %v1661 = vpop.permute.xlu0 %1660
    %v1663 = vadd.f32 %v1657, %v1661
    %v1664 = vtanh.pop %v1663
    %v1666 = vrot.slane %v1650, 2
    %1669 = vrot.lane.b32.xlu0 %v1664, 64
    %v1670 = vpop.permute.xlu0 %1669
    %v1672 = vmul.f32 %v1666, %v1670
    %s1673 = scalar_lea.vmem %s0, 56
    %v1674 = vld [vmem:[%s1673] sm:$0xf]
    %v1676 = vsel %vm50, %v1672, 0
    %1678 = vmatprep.subr.mxu0 %v34
    %1679 = vmatpush1.msra.mxu0 %v33
    %1680 = vmatprep.subr.mxu0 %v36
    %1681 = vmatpush1.msra.mxu0 %v35
    %1682 = vmatprep.subr.mxu0 %v38
    %1683 = vmatpush1.msra.mxu0 %v37
    %1684 = vmatprep.subr.mxu0 %v40
    %1685 = vmatpush1.msra.mxu0 %v39
    %1686 = vmatprep.subr.mxu0 %v42
    %1687 = vmatpush1.msra.mxu0 %v41
    %1688 = vmatprep.subr.mxu0 %v44
    %1689 = vmatpush1.msra.mxu0 %v43
    %1690 = vmatprep.subr.mxu0 %v46
    %1691 = vmatpush1.msra.mxu0 %v45
    %1692 = vmatprep.subr.mxu0 %v48
    %1693 = vmatpush1.msra.mxu0 %v47
    %1694 = vmatprep.subr.mxu0 0.0
    %1695 = vmatpush1.msra.mxu0 0.0
    %1696 = vmatprep.subr.mxu0 0.0
    %1697 = vmatpush1.msra.mxu0 0.0
    %1698 = vmatprep.subr.mxu0 0.0
    %1699 = vmatpush1.msra.mxu0 0.0
    %1700 = vmatprep.subr.mxu0 0.0
    %1701 = vmatpush1.msra.mxu0 0.0
    %1702 = vmatprep.subr.mxu0 0.0
    %1703 = vmatpush1.msra.mxu0 0.0
    %1704 = vmatprep.subr.mxu0 0.0
    %1705 = vmatpush1.msra.mxu0 0.0
    %1706 = vmatprep.subr.mxu0 0.0
    %1707 = vmatpush1.msra.mxu0 0.0
    %1708 = vmatprep.subr.mxu0 0.0
    %1709 = vmatpush1.msra.mxu0 0.0
    %1710 = vmatprep.subr.mxu0 0.0
    %1711 = vmatpush1.msra.mxu0 0.0
    %1712 = vmatprep.subr.mxu0 0.0
    %1713 = vmatpush1.msra.mxu0 0.0
    %1714 = vmatprep.subr.mxu0 0.0
    %1715 = vmatpush1.msra.mxu0 0.0
    %1716 = vmatprep.subr.mxu0 0.0
    %1717 = vmatpush1.msra.mxu0 0.0
    %1718 = vmatprep.subr.mxu0 0.0
    %1719 = vmatpush1.msra.mxu0 0.0
    %1720 = vmatprep.subr.mxu0 0.0
    %1721 = vmatpush1.msra.mxu0 0.0
    %1722 = vmatprep.subr.mxu0 0.0
    %1723 = vmatpush1.msra.mxu0 0.0
    %1724 = vmatprep.subr.mxu0 0.0
    %1725 = vmatpush1.msra.mxu0 0.0
    %1726 = vmatprep.subr.mxu0 0.0
    %1727 = vmatpush1.msra.mxu0 0.0
    %1728 = vmatprep.subr.mxu0 0.0
    %1729 = vmatpush1.msra.mxu0 0.0
    %1730 = vmatprep.subr.mxu0 0.0
    %1731 = vmatpush1.msra.mxu0 0.0
    %1732 = vmatprep.subr.mxu0 0.0
    %1733 = vmatpush1.msra.mxu0 0.0
    %1734 = vmatprep.subr.mxu0 0.0
    %1735 = vmatpush1.msra.mxu0 0.0
    %1736 = vmatprep.subr.mxu0 0.0
    %1737 = vmatpush1.msra.mxu0 0.0
    %1738 = vmatprep.subr.mxu0 0.0
    %1739 = vmatpush1.msra.mxu0 0.0
    %1740 = vmatprep.subr.mxu0 0.0
    %1741 = vmatpush1.msra.mxu0 0.0
    %1742 = vmatprep.mubr.f32.mxu0 0.0
    %1743 = vmatmul.mubr.f32.gmra.mrb[0].mxu0 %v1676
    %v1744 = vpop.f32.mrb[0].mxu0
    %v1745 = vadd.f32 0.0, %v1744
    %v1746 = vpop.f32.mrb[0].mxu0
    %v1747 = vadd.f32 0.0, %v1746
    %1748 = vdwg.mxu0
    %v1751 = vcombine.low %v1745, %v1747
    %v1753 = vunpack.c.l.s4 1983009808
    %v1754 = vunpack.c.0.s8 %v1753
    %v1755 = vlaneseq
    %v1756 = vshrl.u32 %v1755, 7
    %v1757 = vsub.s32 %v1754, %v1756
    %v1758 = vrot.slane %v1751, %v1757
    %v1760 = vadd.f32 %v1674, %v1758
    %v1761 = vxor.u32 %v1760, 2147483648
    %v1762 = vmul.f32 %v1761, 1.442695
    %v1763 = vpow.pop %v1762
    %v1764 = vadd.f32 %v1763, 1.0
    %v1765 = vrcp.pop %v1764
    %v1766 = vmul.f32 1.0, %v1765
    %1768 = vrot.lane.b32.xlu0 %v1760, 64
    %v1769 = vpop.permute.xlu0 %1768
    %v1770 = vrot.slane %v1769, 2
    %v1772 = vtanh.pop %v1770
    %v1773 = vmul.f32 %v1766, %v1663
    %v1774 = vmul.f32 %v1766, %v1772
    %1776 = vrot.lane.b32.xlu0 %v1774, 64
    %v1777 = vpop.permute.xlu0 %1776
    %v1779 = vadd.f32 %v1773, %v1777
    %v1780 = vtanh.pop %v1779
    %v1782 = vrot.slane %v1766, 2
    %1785 = vrot.lane.b32.xlu0 %v1780, 64
    %v1786 = vpop.permute.xlu0 %1785
    %v1788 = vmul.f32 %v1782, %v1786
    %v1789 = vld [vmem:[%s2] sm:$0xff]
    %v1790 = vld [vmem:[%s2 + $0x8] sm:$0xff]
    %v1791 = vld [vmem:[%s2 + $0x10] sm:$0xff]
    %v1792 = vld [vmem:[%s2 + $0x18] sm:$0xff]
    %v1793 = vld [vmem:[%s2 + $0x20] sm:$0xff]
    %v1794 = vld [vmem:[%s2 + $0x28] sm:$0xff]
    %v1795 = vld [vmem:[%s2 + $0x30] sm:$0xff]
    %v1796 = vld [vmem:[%s2 + $0x38] sm:$0xff]
    %v1797 = vld [vmem:[#allocation2] sm:$0x1]
    %v1799 = vlaneseq
    %v1800 = vshrl.u32 %v1799, 7
    %v1801 = vsub.s32 0, %v1800
    %v1802 = vrot.slane %v1797, %v1801
    %v1805 = vsel %vm50, %v1788, 0
    %1807 = vmatprep.subr.mxu0 0.0
    %1808 = vmatpush1.msra.mxu0 %v1789
    %1809 = vmatprep.subr.mxu0 0.0
    %1810 = vmatpush1.msra.mxu0 %v1790
    %1811 = vmatprep.subr.mxu0 0.0
    %1812 = vmatpush1.msra.mxu0 %v1791
    %1813 = vmatprep.subr.mxu0 0.0
    %1814 = vmatpush1.msra.mxu0 %v1792
    %1815 = vmatprep.subr.mxu0 0.0
    %1816 = vmatpush1.msra.mxu0 %v1793
    %1817 = vmatprep.subr.mxu0 0.0
    %1818 = vmatpush1.msra.mxu0 %v1794
    %1819 = vmatprep.subr.mxu0 0.0
    %1820 = vmatpush1.msra.mxu0 %v1795
    %1821 = vmatprep.subr.mxu0 0.0
    %1822 = vmatpush1.msra.mxu0 %v1796
    %1823 = vmatprep.subr.mxu0 0.0
    %1824 = vmatpush1.msra.mxu0 0.0
    %1825 = vmatprep.subr.mxu0 0.0
    %1826 = vmatpush1.msra.mxu0 0.0
    %1827 = vmatprep.subr.mxu0 0.0
    %1828 = vmatpush1.msra.mxu0 0.0
    %1829 = vmatprep.subr.mxu0 0.0
    %1830 = vmatpush1.msra.mxu0 0.0
    %1831 = vmatprep.subr.mxu0 0.0
    %1832 = vmatpush1.msra.mxu0 0.0
    %1833 = vmatprep.subr.mxu0 0.0
    %1834 = vmatpush1.msra.mxu0 0.0
    %1835 = vmatprep.subr.mxu0 0.0
    %1836 = vmatpush1.msra.mxu0 0.0
    %1837 = vmatprep.subr.mxu0 0.0
    %1838 = vmatpush1.msra.mxu0 0.0
    %1839 = vmatprep.subr.mxu0 0.0
    %1840 = vmatpush1.msra.mxu0 0.0
    %1841 = vmatprep.subr.mxu0 0.0
    %1842 = vmatpush1.msra.mxu0 0.0
    %1843 = vmatprep.subr.mxu0 0.0
    %1844 = vmatpush1.msra.mxu0 0.0
    %1845 = vmatprep.subr.mxu0 0.0
    %1846 = vmatpush1.msra.mxu0 0.0
    %1847 = vmatprep.subr.mxu0 0.0
    %1848 = vmatpush1.msra.mxu0 0.0
    %1849 = vmatprep.subr.mxu0 0.0
    %1850 = vmatpush1.msra.mxu0 0.0
    %1851 = vmatprep.subr.mxu0 0.0
    %1852 = vmatpush1.msra.mxu0 0.0
    %1853 = vmatprep.subr.mxu0 0.0
    %1854 = vmatpush1.msra.mxu0 0.0
    %1855 = vmatprep.subr.mxu0 0.0
    %1856 = vmatpush1.msra.mxu0 0.0
    %1857 = vmatprep.subr.mxu0 0.0
    %1858 = vmatpush1.msra.mxu0 0.0
    %1859 = vmatprep.subr.mxu0 0.0
    %1860 = vmatpush1.msra.mxu0 0.0
    %1861 = vmatprep.subr.mxu0 0.0
    %1862 = vmatpush1.msra.mxu0 0.0
    %1863 = vmatprep.subr.mxu0 0.0
    %1864 = vmatpush1.msra.mxu0 0.0
    %1865 = vmatprep.subr.mxu0 0.0
    %1866 = vmatpush1.msra.mxu0 0.0
    %1867 = vmatprep.subr.mxu0 0.0
    %1868 = vmatpush1.msra.mxu0 0.0
    %1869 = vmatprep.subr.mxu0 0.0
    %1870 = vmatpush1.msra.mxu0 0.0
    %1871 = vmatprep.mubr.f32.mxu0 0.0
    %1872 = vmatmul.mubr.f32.gmra.mrb[0].mxu0 %v1805
    %v1873 = vpop.f32.mrb[0].mxu0
    %v1874 = vadd.f32 %v1802, %v1873
    %v1875 = vpop.f32.mrb[0].mxu0
    %1876 = vdwg.mxu0
    %vm1877 = vcmask 1024
    %1878 = vst.msk [vmem:[%s4] sm:$0x3] %vm1877, %v1874
    // Predicated region
    $region22: #{tpu_custom_call.1} parent=1 // pred_check
      _
    $region23: #{tpu_custom_call.1} parent=1 // pred_check_branch
      %1880 = sbr.rel (0) target = $region25
    $region24: #{tpu_custom_call.1} parent=1 // pred_region
      _
    $region25: #{tpu_custom_call.1} parent=1 // pred_fallthru
      _
    // Predicated region
    $region26: #{tpu_custom_call.1} parent=1 // pred_check
      _
    $region27: #{tpu_custom_call.1} parent=1 // pred_check_branch
      %1882 = sbr.rel (0) target = $region29
    $region28: #{tpu_custom_call.1} parent=1 // pred_region
      _
    $region29: #{tpu_custom_call.1} parent=1 // pred_fallthru
      _
    %1883 = vsyncpa [#allocation4], 1

</llo_original>
